<compile_context>
chip_gen: v5e
topology: v5e:2x2
jax: 0.10.0
libtpu: 0.0.40
codegen_flags: <defaults>
</compile_context>

<pallas_src>
import functools

import jax
import jax.numpy as jnp
from jax.experimental import pallas as pl
from jax.experimental.pallas import tpu as pltpu

NUM_FEATURES = 192
HIDDEN = 256
MAX_BATCH_TILE = 2048


def _cdiv(a, m):
    return -(-a // m)


def _round_up(x, m):
    return _cdiv(x, m) * m


def _choose_tile(b):
    """Balanced batch tiling; prefer >=2 tiles so both v7x TCs get work."""
    n_tiles = max(1, _cdiv(b, MAX_BATCH_TILE))
    if b >= 16:
        n_tiles = max(n_tiles, 2)
    tb = _round_up(_cdiv(b, n_tiles), 8)       # sublane-aligned, balanced
    bp = _round_up(b, tb)
    return tb, bp


# ----------------------------------------------------------------------------
# Kernel: one batch tile of the whole forward pass
# ----------------------------------------------------------------------------
def mtl_kernel(
    x_ref,                                     # (TB, 192) f32
    fw1_ref, fb1_ref,                          # (192, 256) bf16 / (1, 256) f32
    fw2_ref, fb2_ref,                          # (256, 256) bf16 / (1, 256) f32
    fw3_ref, fb3_ref,                          # (256, 192) bf16 / (1, 192) f32
    hw1_ref, hb1_ref,                          # (192, 576) bf16 / (1, 576) f32
    hw2_ref, hb2_ref,                          # (576, NH)  bf16 / (1, NH)  f32
    out_ref,                                   # (TB, NH)   f32 lane-dense slab
):
    bf = jnp.bfloat16

    def lin(h_bf, w_ref, b_ref):
        # bf16 x bf16 -> f32 accumulate on the MXU, f32 bias add on the VPU
        return jnp.dot(h_bf, w_ref[...],
                       preferred_element_type=jnp.float32) + b_ref[...]

    def lin_relu(h_bf, w_ref, b_ref):
        # bias+ReLU in f32, then one cast per layer -> bf16 carried activation
        return jnp.maximum(lin(h_bf, w_ref, b_ref), 0.0).astype(bf)

    x = x_ref[...].astype(bf)                  # in-kernel cast (no wrapper pass)

    # shared trunk (featureNet): 192 -> 256 -> 256 -> 192, all ReLU
    h = lin_relu(x, fw1_ref, fb1_ref)
    h = lin_relu(h, fw2_ref, fb2_ref)
    feat = lin_relu(h, fw3_ref, fb3_ref)

    # fused head first layers: [nodeNet | edgeNet | graphDensity] -> (TB, 576)
    hh = lin_relu(feat, hw1_ref, hb1_ref)
    # fused block-diagonal head second layers -> (TB, NH) f32 slab
    out_ref[...] = lin(hh, hw2_ref, hb2_ref)


# ----------------------------------------------------------------------------
# Wrapper
# ----------------------------------------------------------------------------
@functools.partial(jax.jit, static_argnames=("num_buck",))
def mtl_forward(x, packed_params, *, num_buck):
    (fw1, fb1, fw2, fb2, fw3, fb3, hw1, hb1, hw2, hb2) = packed_params
    b = x.shape[0]
    nh = hw2.shape[1]                          # round_up(3*num_buck, 128)

    tb, bp = _choose_tile(b)
    xb = x if bp == b else jnp.pad(x, ((0, bp - b), (0, 0)))

    weights = (fw1, fb1, fw2, fb2, fw3, fb3, hw1, hb1, hw2, hb2)

    def resident(a):
        # constant index_map -> block never changes -> stays VMEM-resident;
        # single buffer (no need to double-buffer a constant block).
        return pl.BlockSpec(a.shape, lambda i: (0, 0),
                            pipeline_mode=pl.Buffered(1))

    out = pl.pallas_call(
        mtl_kernel,
        out_shape=jax.ShapeDtypeStruct((bp, nh), jnp.float32),
        grid=(bp // tb,),
        in_specs=[pl.BlockSpec((tb, NUM_FEATURES), lambda i: (i, 0))]
                 + [resident(a) for a in weights],
        out_specs=pl.BlockSpec((tb, nh), lambda i: (i, 0)),
        compiler_params=pltpu.CompilerParams(
            dimension_semantics=("parallel",),       # batch tiles independent
            vmem_limit_bytes=32 * 1024 * 1024,       # headroom for v5e default
        ),
    )(xb, *weights)

    pred_nodes = out[:b, 0 * num_buck:1 * num_buck]
    pred_edges = out[:b, 1 * num_buck:2 * num_buck]
    pred_density = out[:b, 2 * num_buck:3 * num_buck]
    return pred_nodes, pred_edges, pred_density


# ----------------------------------------------------------------------------
# Parameter init (PyTorch nn.Linear-style uniform bounds) + packing
# ----------------------------------------------------------------------------
def init_raw_params(key, num_buck):
    sizes = [
        # featureNet
        (NUM_FEATURES, HIDDEN), (HIDDEN, HIDDEN), (HIDDEN, NUM_FEATURES),
        # nodeNet
        (NUM_FEATURES, NUM_FEATURES), (NUM_FEATURES, num_buck),
        # edgeNet
        (NUM_FEATURES, NUM_FEATURES), (NUM_FEATURES, num_buck),
        # graphDensity
        (NUM_FEATURES, NUM_FEATURES), (NUM_FEATURES, num_buck),
    ]
    params = []
    for fan_in, fan_out in sizes:
        key, kw, kb = jax.random.split(key, 3)
        bound = 1.0 / jnp.sqrt(fan_in)
        w = jax.random.uniform(kw, (fan_in, fan_out), jnp.float32, -bound, bound)
        bvec = jax.random.uniform(kb, (1, fan_out), jnp.float32, -bound, bound)
        params += [w, bvec]
    return tuple(params)


def pack_params(raw, num_buck):
    """Pack raw (in,out)-layout params into the kernel's fused bf16 layout."""
    (fw1, fb1, fw2, fb2, fw3, fb3,
     nw1, nb1, nw2, nb2,
     ew1, eb1, ew2, eb2,
     gw1, gb1, gw2, gb2) = raw

    bf = jnp.bfloat16
    nh = _round_up(3 * num_buck, 128)

    # fused head first layers: (192, 576) / (1, 576)
    hw1 = jnp.concatenate([nw1, ew1, gw1], axis=1)
    hb1 = jnp.concatenate([nb1, eb1, gb1], axis=1)

    # block-diagonal fused head second layers: (576, NH) / (1, NH)
    hw2 = jnp.zeros((3 * NUM_FEATURES, nh), jnp.float32)
    hw2 = hw2.at[0:NUM_FEATURES, 0:num_buck].set(nw2)
    hw2 = hw2.at[NUM_FEATURES:2 * NUM_FEATURES, num_buck:2 * num_buck].set(ew2)
    hw2 = hw2.at[2 * NUM_FEATURES:3 * NUM_FEATURES, 2 * num_buck:3 * num_buck].set(gw2)
    hb2 = jnp.zeros((1, nh), jnp.float32)
    hb2 = hb2.at[:, 0:num_buck].set(nb2)
    hb2 = hb2.at[:, num_buck:2 * num_buck].set(eb2)
    hb2 = hb2.at[:, 2 * num_buck:3 * num_buck].set(gb2)

    return (fw1.astype(bf), fb1,
            fw2.astype(bf), fb2,
            fw3.astype(bf), fb3,
            hw1.astype(bf), hb1,
            hw2.astype(bf), hb2)


def reference_forward(x, raw_params):
    """Plain-JAX reference mirroring the PyTorch forward with the kernel's
    numerics (bf16 matmul operands / bf16 carried activations, f32 accumulate
    and f32 bias+ReLU)."""
    p = list(raw_params)
    bf = jnp.bfloat16

    def lin(h, w, b):
        return jnp.dot(h.astype(bf), w.astype(bf),
                       preferred_element_type=jnp.float32) + b

    def lin_relu(h, w, b):
        return jnp.maximum(lin(h, w, b), 0.0).astype(bf)

    feat = x.astype(bf)
    for i in range(3):                       # featureNet (all ReLU)
        feat = lin_relu(feat, p[2 * i], p[2 * i + 1])
    outs = []
    for head in range(3):                    # nodeNet, edgeNet, graphDensity
        o = 6 + head * 4
        h = lin_relu(feat, p[o], p[o + 1])
        outs.append(lin(h, p[o + 2], p[o + 3]))
    return tuple(outs)


# ----------------------------------------------------------------------------
if __name__ == "__main__":
    BATCH = 24          # exercises 2 batch tiles + a remainder-padded tile
    NUM_BUCK = 16

    key = jax.random.PRNGKey(0)
    key, kx = jax.random.split(key)
    x = jax.random.normal(kx, (BATCH, NUM_FEATURES), jnp.float32)
    raw_params = init_raw_params(key, NUM_BUCK)
    packed_params = pack_params(raw_params, NUM_BUCK)

    pred_nodes, pred_edges, pred_density = jax.block_until_ready(
        mtl_forward(x, packed_params, num_buck=NUM_BUCK)
    )

    # sanity check vs. plain-JAX reference with matching bf16 matmul numerics
    ref_nodes, ref_edges, ref_density = reference_forward(x, raw_params)
    assert pred_nodes.shape == (BATCH, NUM_BUCK)
    assert pred_edges.shape == (BATCH, NUM_BUCK)
    assert pred_density.shape == (BATCH, NUM_BUCK)
    assert jnp.allclose(pred_nodes, ref_nodes, atol=5e-3, rtol=5e-3)
    assert jnp.allclose(pred_edges, ref_edges, atol=5e-3, rtol=5e-3)
    assert jnp.allclose(pred_density, ref_density, atol=5e-3, rtol=5e-3)

    print("KERNEL_OK")
</pallas_src>

<mosaic_0001>
module attributes {stable_mosaic.version = 11 : i64} {
  func.func @mtl_kernel(%arg0: i32, %arg1: memref<16x192xf32, #tpu.memory_space<vmem>>, %arg2: memref<192x256xbf16, #tpu.memory_space<vmem>>, %arg3: memref<1x256xf32, #tpu.memory_space<vmem>>, %arg4: memref<256x256xbf16, #tpu.memory_space<vmem>>, %arg5: memref<1x256xf32, #tpu.memory_space<vmem>>, %arg6: memref<256x192xbf16, #tpu.memory_space<vmem>>, %arg7: memref<1x192xf32, #tpu.memory_space<vmem>>, %arg8: memref<192x576xbf16, #tpu.memory_space<vmem>>, %arg9: memref<1x576xf32, #tpu.memory_space<vmem>>, %arg10: memref<576x128xbf16, #tpu.memory_space<vmem>>, %arg11: memref<1x128xf32, #tpu.memory_space<vmem>>, %arg12: memref<16x128xf32, #tpu.memory_space<vmem>>) attributes {dimension_semantics = [#tpu.dimension_semantics<parallel>], iteration_bounds = array<i64: 2>, scalar_prefetch = 0 : i64, scratch_operands = 0 : i64, tpu.core_type = #tpu.core_type<tc>, window_params = [{transform_indices = @transform_0, window_bounds = array<i64: 16, 192>}, {pipeline_mode = #tpu.pipeline_mode<synchronous>, transform_indices = @transform_1, window_bounds = array<i64: 192, 256>}, {pipeline_mode = #tpu.pipeline_mode<synchronous>, transform_indices = @transform_2, window_bounds = array<i64: 1, 256>}, {pipeline_mode = #tpu.pipeline_mode<synchronous>, transform_indices = @transform_3, window_bounds = array<i64: 256, 256>}, {pipeline_mode = #tpu.pipeline_mode<synchronous>, transform_indices = @transform_4, window_bounds = array<i64: 1, 256>}, {pipeline_mode = #tpu.pipeline_mode<synchronous>, transform_indices = @transform_5, window_bounds = array<i64: 256, 192>}, {pipeline_mode = #tpu.pipeline_mode<synchronous>, transform_indices = @transform_6, window_bounds = array<i64: 1, 192>}, {pipeline_mode = #tpu.pipeline_mode<synchronous>, transform_indices = @transform_7, window_bounds = array<i64: 192, 576>}, {pipeline_mode = #tpu.pipeline_mode<synchronous>, transform_indices = @transform_8, window_bounds = array<i64: 1, 576>}, {pipeline_mode = #tpu.pipeline_mode<synchronous>, transform_indices = @transform_9, window_bounds = array<i64: 576, 128>}, {pipeline_mode = #tpu.pipeline_mode<synchronous>, transform_indices = @transform_10, window_bounds = array<i64: 1, 128>}, {transform_indices = @transform_11, window_bounds = array<i64: 16, 128>}]} {
    %c0 = arith.constant 0 : index
    %c0_0 = arith.constant 0 : index
    %0 = vector.load %arg1[%c0, %c0_0] : memref<16x192xf32, #tpu.memory_space<vmem>>, vector<16x192xf32>
    %1 = arith.truncf %0 : vector<16x192xf32> to vector<16x192xbf16>
    %c0_1 = arith.constant 0 : index
    %c0_2 = arith.constant 0 : index
    %2 = vector.load %arg2[%c0_1, %c0_2] : memref<192x256xbf16, #tpu.memory_space<vmem>>, vector<192x256xbf16>
    %cst = arith.constant dense<0.000000e+00> : vector<16x256xf32>
    %3 = tpu.matmul %1, %2, %cst {dimension_numbers = #tpu.dot_dimension_numbers<[1], [0], [0], [1], [0, 0, 1, 1], [], []>} : vector<16x192xbf16>, vector<192x256xbf16>, vector<16x256xf32> -> vector<16x256xf32>
    %c0_3 = arith.constant 0 : index
    %c0_4 = arith.constant 0 : index
    %4 = vector.load %arg3[%c0_3, %c0_4] : memref<1x256xf32, #tpu.memory_space<vmem>>, vector<1x256xf32>
    %5 = vector.broadcast %4 : vector<1x256xf32> to vector<16x256xf32>
    %6 = arith.addf %3, %5 : vector<16x256xf32>
    %cst_5 = arith.constant 0.000000e+00 : f32
    %7 = vector.broadcast %cst_5 : f32 to vector<16x256xf32>
    %8 = arith.maximumf %6, %7 : vector<16x256xf32>
    %9 = arith.truncf %8 : vector<16x256xf32> to vector<16x256xbf16>
    %c0_6 = arith.constant 0 : index
    %c0_7 = arith.constant 0 : index
    %10 = vector.load %arg4[%c0_6, %c0_7] : memref<256x256xbf16, #tpu.memory_space<vmem>>, vector<256x256xbf16>
    %cst_8 = arith.constant dense<0.000000e+00> : vector<16x256xf32>
    %11 = tpu.matmul %9, %10, %cst_8 {dimension_numbers = #tpu.dot_dimension_numbers<[1], [0], [0], [1], [0, 0, 1, 1], [], []>} : vector<16x256xbf16>, vector<256x256xbf16>, vector<16x256xf32> -> vector<16x256xf32>
    %c0_9 = arith.constant 0 : index
    %c0_10 = arith.constant 0 : index
    %12 = vector.load %arg5[%c0_9, %c0_10] : memref<1x256xf32, #tpu.memory_space<vmem>>, vector<1x256xf32>
    %13 = vector.broadcast %12 : vector<1x256xf32> to vector<16x256xf32>
    %14 = arith.addf %11, %13 : vector<16x256xf32>
    %cst_11 = arith.constant 0.000000e+00 : f32
    %15 = vector.broadcast %cst_11 : f32 to vector<16x256xf32>
    %16 = arith.maximumf %14, %15 : vector<16x256xf32>
    %17 = arith.truncf %16 : vector<16x256xf32> to vector<16x256xbf16>
    %c0_12 = arith.constant 0 : index
    %c0_13 = arith.constant 0 : index
    %18 = vector.load %arg6[%c0_12, %c0_13] : memref<256x192xbf16, #tpu.memory_space<vmem>>, vector<256x192xbf16>
    %cst_14 = arith.constant dense<0.000000e+00> : vector<16x192xf32>
    %19 = tpu.matmul %17, %18, %cst_14 {dimension_numbers = #tpu.dot_dimension_numbers<[1], [0], [0], [1], [0, 0, 1, 1], [], []>} : vector<16x256xbf16>, vector<256x192xbf16>, vector<16x192xf32> -> vector<16x192xf32>
    %c0_15 = arith.constant 0 : index
    %c0_16 = arith.constant 0 : index
    %20 = vector.load %arg7[%c0_15, %c0_16] : memref<1x192xf32, #tpu.memory_space<vmem>>, vector<1x192xf32>
    %21 = vector.broadcast %20 : vector<1x192xf32> to vector<16x192xf32>
    %22 = arith.addf %19, %21 : vector<16x192xf32>
    %cst_17 = arith.constant 0.000000e+00 : f32
    %23 = vector.broadcast %cst_17 : f32 to vector<16x192xf32>
    %24 = arith.maximumf %22, %23 : vector<16x192xf32>
    %25 = arith.truncf %24 : vector<16x192xf32> to vector<16x192xbf16>
    %c0_18 = arith.constant 0 : index
    %c0_19 = arith.constant 0 : index
    %26 = vector.load %arg8[%c0_18, %c0_19] : memref<192x576xbf16, #tpu.memory_space<vmem>>, vector<192x576xbf16>
    %cst_20 = arith.constant dense<0.000000e+00> : vector<16x576xf32>
    %27 = tpu.matmul %25, %26, %cst_20 {dimension_numbers = #tpu.dot_dimension_numbers<[1], [0], [0], [1], [0, 0, 1, 1], [], []>} : vector<16x192xbf16>, vector<192x576xbf16>, vector<16x576xf32> -> vector<16x576xf32>
    %c0_21 = arith.constant 0 : index
    %c0_22 = arith.constant 0 : index
    %28 = vector.load %arg9[%c0_21, %c0_22] : memref<1x576xf32, #tpu.memory_space<vmem>>, vector<1x576xf32>
    %29 = vector.broadcast %28 : vector<1x576xf32> to vector<16x576xf32>
    %30 = arith.addf %27, %29 : vector<16x576xf32>
    %cst_23 = arith.constant 0.000000e+00 : f32
    %31 = vector.broadcast %cst_23 : f32 to vector<16x576xf32>
    %32 = arith.maximumf %30, %31 : vector<16x576xf32>
    %33 = arith.truncf %32 : vector<16x576xf32> to vector<16x576xbf16>
    %c0_24 = arith.constant 0 : index
    %c0_25 = arith.constant 0 : index
    %34 = vector.load %arg10[%c0_24, %c0_25] : memref<576x128xbf16, #tpu.memory_space<vmem>>, vector<576x128xbf16>
    %cst_26 = arith.constant dense<0.000000e+00> : vector<16x128xf32>
    %35 = tpu.matmul %33, %34, %cst_26 {dimension_numbers = #tpu.dot_dimension_numbers<[1], [0], [0], [1], [0, 0, 1, 1], [], []>} : vector<16x576xbf16>, vector<576x128xbf16>, vector<16x128xf32> -> vector<16x128xf32>
    %c0_27 = arith.constant 0 : index
    %c0_28 = arith.constant 0 : index
    %36 = vector.load %arg11[%c0_27, %c0_28] : memref<1x128xf32, #tpu.memory_space<vmem>>, vector<1x128xf32>
    %37 = vector.broadcast %36 : vector<1x128xf32> to vector<16x128xf32>
    %38 = arith.addf %35, %37 : vector<16x128xf32>
    %c0_29 = arith.constant 0 : index
    %c0_30 = arith.constant 0 : index
    %39 = vector.load %arg12[%c0_29, %c0_30] : memref<16x128xf32, #tpu.memory_space<vmem>>, vector<16x128xf32>
    tpu.vector_store %arg12[%c0_29, %c0_30], %38 {strides = array<i32>} : memref<16x128xf32, #tpu.memory_space<vmem>>, vector<16x128xf32>,
    return
  }
  func.func @transform_0(%arg0: i32) -> (i32, i32) {
    %c0_i32 = arith.constant 0 : i32
    %c0_i32_0 = arith.constant 0 : i32
    return %arg0, %c0_i32 : i32, i32
  }
  func.func @transform_1(%arg0: i32) -> (i32, i32) {
    %c0_i32 = arith.constant 0 : i32
    %c0_i32_0 = arith.constant 0 : i32
    %c0_i32_1 = arith.constant 0 : i32
    return %c0_i32, %c0_i32_0 : i32, i32
  }
  func.func @transform_2(%arg0: i32) -> (i32, i32) {
    %c0_i32 = arith.constant 0 : i32
    %c0_i32_0 = arith.constant 0 : i32
    %c0_i32_1 = arith.constant 0 : i32
    return %c0_i32, %c0_i32_0 : i32, i32
  }
  func.func @transform_3(%arg0: i32) -> (i32, i32) {
    %c0_i32 = arith.constant 0 : i32
    %c0_i32_0 = arith.constant 0 : i32
    %c0_i32_1 = arith.constant 0 : i32
    return %c0_i32, %c0_i32_0 : i32, i32
  }
  func.func @transform_4(%arg0: i32) -> (i32, i32) {
    %c0_i32 = arith.constant 0 : i32
    %c0_i32_0 = arith.constant 0 : i32
    %c0_i32_1 = arith.constant 0 : i32
    return %c0_i32, %c0_i32_0 : i32, i32
  }
  func.func @transform_5(%arg0: i32) -> (i32, i32) {
    %c0_i32 = arith.constant 0 : i32
    %c0_i32_0 = arith.constant 0 : i32
    %c0_i32_1 = arith.constant 0 : i32
    return %c0_i32, %c0_i32_0 : i32, i32
  }
  func.func @transform_6(%arg0: i32) -> (i32, i32) {
    %c0_i32 = arith.constant 0 : i32
    %c0_i32_0 = arith.constant 0 : i32
    %c0_i32_1 = arith.constant 0 : i32
    return %c0_i32, %c0_i32_0 : i32, i32
  }
  func.func @transform_7(%arg0: i32) -> (i32, i32) {
    %c0_i32 = arith.constant 0 : i32
    %c0_i32_0 = arith.constant 0 : i32
    %c0_i32_1 = arith.constant 0 : i32
    return %c0_i32, %c0_i32_0 : i32, i32
  }
  func.func @transform_8(%arg0: i32) -> (i32, i32) {
    %c0_i32 = arith.constant 0 : i32
    %c0_i32_0 = arith.constant 0 : i32
    %c0_i32_1 = arith.constant 0 : i32
    return %c0_i32, %c0_i32_0 : i32, i32
  }
  func.func @transform_9(%arg0: i32) -> (i32, i32) {
    %c0_i32 = arith.constant 0 : i32
    %c0_i32_0 = arith.constant 0 : i32
    %c0_i32_1 = arith.constant 0 : i32
    return %c0_i32, %c0_i32_0 : i32, i32
  }
  func.func @transform_10(%arg0: i32) -> (i32, i32) {
    %c0_i32 = arith.constant 0 : i32
    %c0_i32_0 = arith.constant 0 : i32
    %c0_i32_1 = arith.constant 0 : i32
    return %c0_i32, %c0_i32_0 : i32, i32
  }
  func.func @transform_11(%arg0: i32) -> (i32, i32) {
    %c0_i32 = arith.constant 0 : i32
    %c0_i32_0 = arith.constant 0 : i32
    return %arg0, %c0_i32 : i32, i32
  }
}

</mosaic_0001>

<llo_original>
// kernel: mtl_forward.1
$region0: #{mtl_forward.1}
  #allocation0 [shape = 'u32[]', space=smem, size = 0x4, offset = 0x4, fixed_abs, tag = 'smem constant byte address 0x4 - core index']
  #allocation1 [shape = 'u32[72,128]{1,0:T(1,128)}', space=vmem, size = 0x9000, scoped, tag = 'internal scratch']
  %s0 = inlined_call_operand.vmem [shape: f32[32,192], index: 0, kind: input, shape index: {}]
  %s1 = inlined_call_operand.hbm [shape: bf16[192,256], index: 1, kind: input, shape index: {}]
  %s2 = inlined_call_operand.vmem [shape: f32[1,256], index: 2, kind: input, shape index: {}]
  %s3 = inlined_call_operand.hbm [shape: bf16[256,256], index: 3, kind: input, shape index: {}]
  %s4 = inlined_call_operand.vmem [shape: f32[1,256], index: 4, kind: input, shape index: {}]
  %s5 = inlined_call_operand.vmem [shape: bf16[256,192], index: 5, kind: input, shape index: {}]
  %s6 = inlined_call_operand.vmem [shape: f32[1,192], index: 6, kind: input, shape index: {}]
  %s7 = inlined_call_operand.vmem [shape: bf16[192,576], index: 7, kind: input, shape index: {}]
  %s8 = inlined_call_operand.vmem [shape: f32[1,576], index: 8, kind: input, shape index: {}]
  %s9 = inlined_call_operand.hbm [shape: bf16[576,128], index: 9, kind: input, shape index: {}]
  %s10 = inlined_call_operand.vmem [shape: f32[1,128], index: 10, kind: input, shape index: {}]
  %s11 = inlined_call_operand.vmem [shape: f32[32,128], index: 11, kind: output, shape index: {}]
  %s12 = sld [smem:[#allocation0]]
  $region89: #{mtl_forward.1} parent=0
    _
  %s14 = ssub.s32 1, %s12
  %s15 = scalar_select 0, %s14, %s12
  $region1: #{mtl_forward.1} parent=0
    #allocation2 [shape = 'u8[98304]{0}', space=vmem, size = 0x18000, scoped, tag = 'input window, operand 1, single buffered']
    #allocation3 [shape = 's32[2]{0}', space=sflag, size = 0x8, scoped, tag = 'scoped memory for mtl_forward.1']
    #allocation4 [shape = 'u8[131072]{0}', space=vmem, size = 0x20000, scoped, tag = 'input window, operand 3, single buffered']
    #allocation5 [shape = 's32[1]{0}', space=sflag, size = 0x4, scoped, tag = 'scoped memory for mtl_forward.1']
    #allocation6 [shape = 'u8[147456]{0}', space=vmem, size = 0x24000, scoped, tag = 'input window, operand 9, single buffered']
    %16 = vsyncpa [#allocation3], 0
    %17 = vsyncpa [#allocation5], 0
    loop: start=0, step=1, limit=4
    $region2: #{mtl_forward.1} parent=1 // loop_pre_header
      _
    $region3: #{mtl_forward.1} parent=1 // loop_header
      %s19 = sphi 0, %s23
      %p20 = scmp.ge.s32.totalorder %s19, 4
      %s29 = sphi 0, %s31
      %s32 = sphi 0, %s29
      %s33 = sphi 0, %s32
      %s49 = sphi 0, %s33
      %s53 = sphi 0, %s53
      %s55 = sphi 0, %s53
      %s56 = sphi 0, %s55
      %s70 = sphi 0, %s56
      %s74 = sphi 0, %s74
      %s76 = sphi 0, %s74
      %s77 = sphi 0, %s76
      %s91 = sphi 0, %s77
      %s95 = sphi 0, %s95
      %s97 = sphi 0, %s95
      %s98 = sphi 0, %s97
      %s112 = sphi 0, %s98
      %s116 = sphi 0, %s116
      %s118 = sphi 0, %s116
      %s119 = sphi 0, %s118
      %s133 = sphi 0, %s119
      %s137 = sphi 0, %s137
      %s139 = sphi 0, %s137
      %s140 = sphi 0, %s139
      %s154 = sphi 0, %s140
      %s158 = sphi 0, %s158
      %s160 = sphi 0, %s158
      %s161 = sphi 0, %s160
      %s175 = sphi 0, %s161
      %s179 = sphi 0, %s179
      %s181 = sphi 0, %s179
      %s182 = sphi 0, %s181
      %s196 = sphi 0, %s182
      %s200 = sphi 0, %s200
      %s202 = sphi 0, %s200
      %s203 = sphi 0, %s202
      %s217 = sphi 0, %s203
      %s221 = sphi 0, %s221
      %s223 = sphi 0, %s221
      %s224 = sphi 0, %s223
      %s238 = sphi 0, %s224
      %s242 = sphi 0, %s242
      %s244 = sphi 0, %s242
      %s245 = sphi 0, %s244
      %s259 = sphi 0, %s245
      %s265 = sphi 0, %s267
      %s268 = sphi 0, %s265
      %s269 = sphi 0, %s268
      %s285 = sphi 0, %s269
    $region4: #{mtl_forward.1} parent=1 // loop_header_branch
      %22 = sbr.rel (%p20) target = $region8
    $region5: #{mtl_forward.1} parent=1 // loop_body
      %s24 = ssub.s32 %s19, 1
      %s25 = ssub.s32 %s19, 2
      %s26 = sadd.s32 %s19, 1
      %s27 = ssub.s32 %s19, %s26
      %p28 = scmp.eq.s32.totalorder %s27, 0
      %s30 = sadd.s32 %s29, 1
      %s31 = scalar_select %p28, %s29, %s30
      %p34 = pneg %p28
      %p35 = scmp.eq.s32.totalorder %s19, 1
      %p36 = por %p34, %p35
      %p37 = scmp.ne.s32.totalorder %s29, %s32
      %p38 = scmp.eq.s32.totalorder %s19, 0
      %p39 = por %p37, %p38
      %p40 = scmp.ne.s32.totalorder %s29, %s32
      %p41 = scmp.eq.s32.totalorder %s24, 1
      %p42 = por %p40, %p41
      %p43 = scmp.ne.s32.totalorder %s32, %s33
      %p44 = scmp.eq.s32.totalorder %s24, 0
      %p45 = por %p43, %p44
      %p46 = scmp.ne.s32.totalorder %s32, %s33
      %p47 = scmp.eq.s32.totalorder %s25, 1
      %p48 = por %p46, %p47
      %p50 = scmp.ne.s32.totalorder %s33, %s49
      %p51 = scmp.eq.s32.totalorder %s25, 0
      %p52 = por %p50, %p51
      %s54 = sadd.s32 %s53, 1
      %p57 = scmp.eq.s32.totalorder %s19, 1
      %p58 = scmp.ne.s32.totalorder %s53, %s55
      %p59 = scmp.eq.s32.totalorder %s19, 0
      %p60 = por %p58, %p59
      %p61 = scmp.ne.s32.totalorder %s53, %s55
      %p62 = scmp.eq.s32.totalorder %s24, 1
      %p63 = por %p61, %p62
      %p64 = scmp.ne.s32.totalorder %s55, %s56
      %p65 = scmp.eq.s32.totalorder %s24, 0
      %p66 = por %p64, %p65
      %p67 = scmp.ne.s32.totalorder %s55, %s56
      %p68 = scmp.eq.s32.totalorder %s25, 1
      %p69 = por %p67, %p68
      %p71 = scmp.ne.s32.totalorder %s56, %s70
      %p72 = scmp.eq.s32.totalorder %s25, 0
      %p73 = por %p71, %p72
      %s75 = sadd.s32 %s74, 1
      %p78 = scmp.eq.s32.totalorder %s19, 1
      %p79 = scmp.ne.s32.totalorder %s74, %s76
      %p80 = scmp.eq.s32.totalorder %s19, 0
      %p81 = por %p79, %p80
      %p82 = scmp.ne.s32.totalorder %s74, %s76
      %p83 = scmp.eq.s32.totalorder %s24, 1
      %p84 = por %p82, %p83
      %p85 = scmp.ne.s32.totalorder %s76, %s77
      %p86 = scmp.eq.s32.totalorder %s24, 0
      %p87 = por %p85, %p86
      %p88 = scmp.ne.s32.totalorder %s76, %s77
      %p89 = scmp.eq.s32.totalorder %s25, 1
      %p90 = por %p88, %p89
      %p92 = scmp.ne.s32.totalorder %s77, %s91
      %p93 = scmp.eq.s32.totalorder %s25, 0
      %p94 = por %p92, %p93
      %s96 = sadd.s32 %s95, 1
      %p99 = scmp.eq.s32.totalorder %s19, 1
      %p100 = scmp.ne.s32.totalorder %s95, %s97
      %p101 = scmp.eq.s32.totalorder %s19, 0
      %p102 = por %p100, %p101
      %p103 = scmp.ne.s32.totalorder %s95, %s97
      %p104 = scmp.eq.s32.totalorder %s24, 1
      %p105 = por %p103, %p104
      %p106 = scmp.ne.s32.totalorder %s97, %s98
      %p107 = scmp.eq.s32.totalorder %s24, 0
      %p108 = por %p106, %p107
      %p109 = scmp.ne.s32.totalorder %s97, %s98
      %p110 = scmp.eq.s32.totalorder %s25, 1
      %p111 = por %p109, %p110
      %p113 = scmp.ne.s32.totalorder %s98, %s112
      %p114 = scmp.eq.s32.totalorder %s25, 0
      %p115 = por %p113, %p114
      %s117 = sadd.s32 %s116, 1
      %p120 = scmp.eq.s32.totalorder %s19, 1
      %p121 = scmp.ne.s32.totalorder %s116, %s118
      %p122 = scmp.eq.s32.totalorder %s19, 0
      %p123 = por %p121, %p122
      %p124 = scmp.ne.s32.totalorder %s116, %s118
      %p125 = scmp.eq.s32.totalorder %s24, 1
      %p126 = por %p124, %p125
      %p127 = scmp.ne.s32.totalorder %s118, %s119
      %p128 = scmp.eq.s32.totalorder %s24, 0
      %p129 = por %p127, %p128
      %p130 = scmp.ne.s32.totalorder %s118, %s119
      %p131 = scmp.eq.s32.totalorder %s25, 1
      %p132 = por %p130, %p131
      %p134 = scmp.ne.s32.totalorder %s119, %s133
      %p135 = scmp.eq.s32.totalorder %s25, 0
      %p136 = por %p134, %p135
      %s138 = sadd.s32 %s137, 1
      %p141 = scmp.eq.s32.totalorder %s19, 1
      %p142 = scmp.ne.s32.totalorder %s137, %s139
      %p143 = scmp.eq.s32.totalorder %s19, 0
      %p144 = por %p142, %p143
      %p145 = scmp.ne.s32.totalorder %s137, %s139
      %p146 = scmp.eq.s32.totalorder %s24, 1
      %p147 = por %p145, %p146
      %p148 = scmp.ne.s32.totalorder %s139, %s140
      %p149 = scmp.eq.s32.totalorder %s24, 0
      %p150 = por %p148, %p149
      %p151 = scmp.ne.s32.totalorder %s139, %s140
      %p152 = scmp.eq.s32.totalorder %s25, 1
      %p153 = por %p151, %p152
      %p155 = scmp.ne.s32.totalorder %s140, %s154
      %p156 = scmp.eq.s32.totalorder %s25, 0
      %p157 = por %p155, %p156
      %s159 = sadd.s32 %s158, 1
      %p162 = scmp.eq.s32.totalorder %s19, 1
      %p163 = scmp.ne.s32.totalorder %s158, %s160
      %p164 = scmp.eq.s32.totalorder %s19, 0
      %p165 = por %p163, %p164
      %p166 = scmp.ne.s32.totalorder %s158, %s160
      %p167 = scmp.eq.s32.totalorder %s24, 1
      %p168 = por %p166, %p167
      %p169 = scmp.ne.s32.totalorder %s160, %s161
      %p170 = scmp.eq.s32.totalorder %s24, 0
      %p171 = por %p169, %p170
      %p172 = scmp.ne.s32.totalorder %s160, %s161
      %p173 = scmp.eq.s32.totalorder %s25, 1
      %p174 = por %p172, %p173
      %p176 = scmp.ne.s32.totalorder %s161, %s175
      %p177 = scmp.eq.s32.totalorder %s25, 0
      %p178 = por %p176, %p177
      %s180 = sadd.s32 %s179, 1
      %p183 = scmp.eq.s32.totalorder %s19, 1
      %p184 = scmp.ne.s32.totalorder %s179, %s181
      %p185 = scmp.eq.s32.totalorder %s19, 0
      %p186 = por %p184, %p185
      %p187 = scmp.ne.s32.totalorder %s179, %s181
      %p188 = scmp.eq.s32.totalorder %s24, 1
      %p189 = por %p187, %p188
      %p190 = scmp.ne.s32.totalorder %s181, %s182
      %p191 = scmp.eq.s32.totalorder %s24, 0
      %p192 = por %p190, %p191
      %p193 = scmp.ne.s32.totalorder %s181, %s182
      %p194 = scmp.eq.s32.totalorder %s25, 1
      %p195 = por %p193, %p194
      %p197 = scmp.ne.s32.totalorder %s182, %s196
      %p198 = scmp.eq.s32.totalorder %s25, 0
      %p199 = por %p197, %p198
      %s201 = sadd.s32 %s200, 1
      %p204 = scmp.eq.s32.totalorder %s19, 1
      %p205 = scmp.ne.s32.totalorder %s200, %s202
      %p206 = scmp.eq.s32.totalorder %s19, 0
      %p207 = por %p205, %p206
      %p208 = scmp.ne.s32.totalorder %s200, %s202
      %p209 = scmp.eq.s32.totalorder %s24, 1
      %p210 = por %p208, %p209
      %p211 = scmp.ne.s32.totalorder %s202, %s203
      %p212 = scmp.eq.s32.totalorder %s24, 0
      %p213 = por %p211, %p212
      %p214 = scmp.ne.s32.totalorder %s202, %s203
      %p215 = scmp.eq.s32.totalorder %s25, 1
      %p216 = por %p214, %p215
      %p218 = scmp.ne.s32.totalorder %s203, %s217
      %p219 = scmp.eq.s32.totalorder %s25, 0
      %p220 = por %p218, %p219
      %s222 = sadd.s32 %s221, 1
      %p225 = scmp.eq.s32.totalorder %s19, 1
      %p226 = scmp.ne.s32.totalorder %s221, %s223
      %p227 = scmp.eq.s32.totalorder %s19, 0
      %p228 = por %p226, %p227
      %p229 = scmp.ne.s32.totalorder %s221, %s223
      %p230 = scmp.eq.s32.totalorder %s24, 1
      %p231 = por %p229, %p230
      %p232 = scmp.ne.s32.totalorder %s223, %s224
      %p233 = scmp.eq.s32.totalorder %s24, 0
      %p234 = por %p232, %p233
      %p235 = scmp.ne.s32.totalorder %s223, %s224
      %p236 = scmp.eq.s32.totalorder %s25, 1
      %p237 = por %p235, %p236
      %p239 = scmp.ne.s32.totalorder %s224, %s238
      %p240 = scmp.eq.s32.totalorder %s25, 0
      %p241 = por %p239, %p240
      %s243 = sadd.s32 %s242, 1
      %p246 = scmp.eq.s32.totalorder %s19, 1
      %p247 = scmp.ne.s32.totalorder %s242, %s244
      %p248 = scmp.eq.s32.totalorder %s19, 0
      %p249 = por %p247, %p248
      %p250 = scmp.ne.s32.totalorder %s242, %s244
      %p251 = scmp.eq.s32.totalorder %s24, 1
      %p252 = por %p250, %p251
      %p253 = scmp.ne.s32.totalorder %s244, %s245
      %p254 = scmp.eq.s32.totalorder %s24, 0
      %p255 = por %p253, %p254
      %p256 = scmp.ne.s32.totalorder %s244, %s245
      %p257 = scmp.eq.s32.totalorder %s25, 1
      %p258 = por %p256, %p257
      %p260 = scmp.ne.s32.totalorder %s245, %s259
      %p261 = scmp.eq.s32.totalorder %s25, 0
      %p262 = por %p260, %p261
      %s263 = ssub.s32 %s19, %s26
      %p264 = scmp.eq.s32.totalorder %s263, 0
      %s266 = sadd.s32 %s265, 1
      %s267 = scalar_select %p264, %s265, %s266
      %p270 = pneg %p264
      %p271 = scmp.eq.s32.totalorder %s19, 1
      %p272 = por %p270, %p271
      %p273 = scmp.ne.s32.totalorder %s265, %s268
      %p274 = scmp.eq.s32.totalorder %s19, 0
      %p275 = por %p273, %p274
      %p276 = scmp.ne.s32.totalorder %s265, %s268
      %p277 = scmp.eq.s32.totalorder %s24, 1
      %p278 = por %p276, %p277
      %p279 = scmp.ne.s32.totalorder %s268, %s269
      %p280 = scmp.eq.s32.totalorder %s24, 0
      %p281 = por %p279, %p280
      %p282 = scmp.ne.s32.totalorder %s268, %s269
      %p283 = scmp.eq.s32.totalorder %s25, 1
      %p284 = por %p282, %p283
      %p286 = scmp.ne.s32.totalorder %s269, %s285
      %p287 = scmp.eq.s32.totalorder %s25, 0
      %p288 = por %p286, %p287
      %p289 = scmp.le.s32.totalorder 1, %s19
      %p290 = scmp.lt.s32.totalorder %s19, 3
      %p291 = pnand %p289, %p290
      %p292 = pneg %p291
      // Predicated region
      $region9: #{mtl_forward.1} parent=5 // pred_check
        _
      $region10: #{mtl_forward.1} parent=5 // pred_check_branch
        %294 = sbr.rel (%p291) target = $region12
      $region11: #{mtl_forward.1} parent=5 // pred_region
        %s295 = ssub.s32 %s19, 1
        // Predicated region
        $region13: #{mtl_forward.1} parent=11 // pred_check
          %p296 = pneg %p66
        $region14: #{mtl_forward.1} parent=11 // pred_check_branch
          %298 = sbr.rel (%p296) target = $region16
        $region15: #{mtl_forward.1} parent=11 // pred_region
          %300 = vsyncadd [#allocation3], 0
          %s301 = sshll.u32 %s1, 4
          %s302 = int_to_ptr.hbm [resolvable:$true] %s301
          %s303 = sshll.u32 [#allocation2], 4
          %s304 = int_to_ptr.vmem [resolvable:$true] %s303
          %309 = dma.hbm_to_vmem [thread:$0]  %s302, 3072, %s304, [#allocation3], 128, 128, 8
        $region16: #{mtl_forward.1} parent=11 // pred_fallthru
          _
        // Predicated region
        $region17: #{mtl_forward.1} parent=11 // pred_check
          %p310 = pneg %p87
        $region18: #{mtl_forward.1} parent=11 // pred_check_branch
          %312 = sbr.rel (%p310) target = $region20
        $region19: #{mtl_forward.1} parent=11 // pred_region
          _
        $region20: #{mtl_forward.1} parent=11 // pred_fallthru
          _
        // Predicated region
        $region21: #{mtl_forward.1} parent=11 // pred_check
          %p313 = pneg %p108
        $region22: #{mtl_forward.1} parent=11 // pred_check_branch
          %315 = sbr.rel (%p313) target = $region24
        $region23: #{mtl_forward.1} parent=11 // pred_region
          %317 = vsyncadd [#allocation5], 0
          %s318 = sshll.u32 %s3, 4
          %s319 = int_to_ptr.hbm [resolvable:$true] %s318
          %s320 = sshll.u32 [#allocation4], 4
          %s321 = int_to_ptr.vmem [resolvable:$true] %s320
          %326 = dma.hbm_to_vmem [thread:$0]  %s319, 4096, %s321, [#allocation5], 128, 128, 8
        $region24: #{mtl_forward.1} parent=11 // pred_fallthru
          _
        // Predicated region
        $region25: #{mtl_forward.1} parent=11 // pred_check
          %p327 = pneg %p129
        $region26: #{mtl_forward.1} parent=11 // pred_check_branch
          %329 = sbr.rel (%p327) target = $region28
        $region27: #{mtl_forward.1} parent=11 // pred_region
          _
        $region28: #{mtl_forward.1} parent=11 // pred_fallthru
          _
        // Predicated region
        $region29: #{mtl_forward.1} parent=11 // pred_check
          %p330 = pneg %p150
        $region30: #{mtl_forward.1} parent=11 // pred_check_branch
          %332 = sbr.rel (%p330) target = $region32
        $region31: #{mtl_forward.1} parent=11 // pred_region
          _
        $region32: #{mtl_forward.1} parent=11 // pred_fallthru
          _
        // Predicated region
        $region33: #{mtl_forward.1} parent=11 // pred_check
          %p333 = pneg %p171
        $region34: #{mtl_forward.1} parent=11 // pred_check_branch
          %335 = sbr.rel (%p333) target = $region36
        $region35: #{mtl_forward.1} parent=11 // pred_region
          _
        $region36: #{mtl_forward.1} parent=11 // pred_fallthru
          _
        // Predicated region
        $region37: #{mtl_forward.1} parent=11 // pred_check
          %p336 = pneg %p192
        $region38: #{mtl_forward.1} parent=11 // pred_check_branch
          %338 = sbr.rel (%p336) target = $region40
        $region39: #{mtl_forward.1} parent=11 // pred_region
          _
        $region40: #{mtl_forward.1} parent=11 // pred_fallthru
          _
        // Predicated region
        $region41: #{mtl_forward.1} parent=11 // pred_check
          %p339 = pneg %p213
        $region42: #{mtl_forward.1} parent=11 // pred_check_branch
          %341 = sbr.rel (%p339) target = $region44
        $region43: #{mtl_forward.1} parent=11 // pred_region
          _
        $region44: #{mtl_forward.1} parent=11 // pred_fallthru
          _
        // Predicated region
        $region45: #{mtl_forward.1} parent=11 // pred_check
          %p342 = pneg %p234
        $region46: #{mtl_forward.1} parent=11 // pred_check_branch
          %344 = sbr.rel (%p342) target = $region48
        $region47: #{mtl_forward.1} parent=11 // pred_region
          %346 = vsyncadd [#allocation5], 0
          %s347 = sshll.u32 %s9, 4
          %s348 = int_to_ptr.hbm [resolvable:$true] %s347
          %s349 = sshll.u32 [#allocation6], 4
          %s350 = int_to_ptr.vmem [resolvable:$true] %s349
          %355 = dma.hbm_to_vmem [thread:$0]  %s348, 4608, %s350, [#allocation5], 64, 64, 4
        $region48: #{mtl_forward.1} parent=11 // pred_fallthru
          _
        // Predicated region
        $region49: #{mtl_forward.1} parent=11 // pred_check
          %p356 = pneg %p255
        $region50: #{mtl_forward.1} parent=11 // pred_check_branch
          %358 = sbr.rel (%p356) target = $region52
        $region51: #{mtl_forward.1} parent=11 // pred_region
          _
        $region52: #{mtl_forward.1} parent=11 // pred_fallthru
          _
      $region12: #{mtl_forward.1} parent=5 // pred_fallthru
        _
      %p359 = scmp.lt.s32.totalorder %s19, 2
      // Predicated region
      $region53: #{mtl_forward.1} parent=5 // pred_check
        %p360 = pneg %p359
      $region54: #{mtl_forward.1} parent=5 // pred_check_branch
        %362 = sbr.rel (%p360) target = $region56
      $region55: #{mtl_forward.1} parent=5 // pred_region
        // Predicated region
        $region57: #{mtl_forward.1} parent=55 // pred_check
          %p363 = pneg %p39
        $region58: #{mtl_forward.1} parent=55 // pred_check_branch
          %365 = sbr.rel (%p363) target = $region60
        $region59: #{mtl_forward.1} parent=55 // pred_region
          %s366 = smul.u32 2, %s19
          %p367 = scmp.lt.s32.totalorder %s366, 3
          %s368 = scalar_select %p367, %s366, 3
          %s369 = smul.addr %s368, 2
          %s370 = smul.addr %s369, 8
          %s371 = scalar_lea.vmem %s0, %s370
          %s372 = smul.u32 2, %s19
        $region60: #{mtl_forward.1} parent=55 // pred_fallthru
          _
      $region56: #{mtl_forward.1} parent=5 // pred_fallthru
        _
      %p373 = scmp.le.s32.totalorder 1, %s19
      %p374 = scmp.lt.s32.totalorder %s19, 3
      %p375 = pnand %p373, %p374
      %p376 = pneg %p375
      // Predicated region
      $region61: #{mtl_forward.1} parent=5 // pred_check
        _
      $region62: #{mtl_forward.1} parent=5 // pred_check_branch
        %378 = sbr.rel (%p375) target = $region64
      $region63: #{mtl_forward.1} parent=5 // pred_region
        %s379 = ssub.s32 %s19, 1
        // Predicated region
        $region65: #{mtl_forward.1} parent=63 // pred_check
          %p380 = pneg %p66
        $region66: #{mtl_forward.1} parent=63 // pred_check_branch
          %382 = sbr.rel (%p380) target = $region68
        $region67: #{mtl_forward.1} parent=63 // pred_region
          %384 = dma.done [#allocation3], 3072
        $region68: #{mtl_forward.1} parent=63 // pred_fallthru
          _
        // Predicated region
        $region69: #{mtl_forward.1} parent=63 // pred_check
          %p385 = pneg %p108
        $region70: #{mtl_forward.1} parent=63 // pred_check_branch
          %387 = sbr.rel (%p385) target = $region72
        $region71: #{mtl_forward.1} parent=63 // pred_region
          %389 = dma.done [#allocation5], 4096
        $region72: #{mtl_forward.1} parent=63 // pred_fallthru
          _
        // Predicated region
        $region73: #{mtl_forward.1} parent=63 // pred_check
          %p390 = pneg %p234
        $region74: #{mtl_forward.1} parent=63 // pred_check_branch
          %392 = sbr.rel (%p390) target = $region76
        $region75: #{mtl_forward.1} parent=63 // pred_region
          %394 = dma.done [#allocation5], 4608
        $region76: #{mtl_forward.1} parent=63 // pred_fallthru
          _
        %s395 = smul.u32 2, %s24
        %p396 = scmp.lt.s32.totalorder %s395, 3
        %s397 = scalar_select %p396, %s395, 3
        %s398 = smul.addr %s397, 2
        %s399 = smul.addr %s398, 8
        %s400 = scalar_lea.vmem %s0, %s399
        %p401 = pneg %p45
        %p402 = pneg %p42
        %p403 = pneg %p66
        %p404 = pneg %p63
        %p405 = pneg %p87
        %p406 = pneg %p84
        %p407 = pneg %p108
        %p408 = pneg %p105
        %p409 = pneg %p129
        %p410 = pneg %p126
        %p411 = pneg %p150
        %p412 = pneg %p147
        %p413 = pneg %p171
        %p414 = pneg %p168
        %p415 = pneg %p192
        %p416 = pneg %p189
        %p417 = pneg %p213
        %p418 = pneg %p210
        %p419 = pneg %p234
        %p420 = pneg %p231
        %p421 = pneg %p255
        %p422 = pneg %p252
        %p423 = pneg %p281
        %p424 = pneg %p278
        %s425 = smul.u32 2, %s24
        %p426 = scmp.lt.s32.totalorder %s425, 3
        %s427 = scalar_select %p426, %s425, 3
        %s428 = smul.addr %s427, 8
        %s429 = scalar_lea.vmem %s11, %s428
        %s430 = smul.u32 2, %s24
        %p431 = scmp.lt.s32.totalorder %s430, 3
        %s432 = scalar_select %p431, %s430, 3
        %s433 = smul.addr %s432, 2
        %s434 = smul.addr %s433, 8
        %s435 = scalar_lea.vmem %s0, %s434
        %s436 = smul.u32 2, %s24
        %s437 = smul.u32 2, %s24
        %p438 = scmp.lt.s32.totalorder %s437, 3
        %s439 = scalar_select %p438, %s437, 3
        %s440 = smul.addr %s439, 8
        %s441 = scalar_lea.vmem %s11, %s440
        %s442 = smul.u32 2, %s24
        %v444 = vld [vmem:[%s435] sm:$0xff]
        %v445 = vld [vmem:[%s435 + $0x8] sm:$0xff]
        %v446 = vld [vmem:[%s435 + $0x10] sm:$0xff]
        %v447 = vld [vmem:[%s435 + $0x18] sm:$0xff]
        %v448 = vpack.c.bf16 %v446, %v444
        %v449 = vpack.c.bf16 %v447, %v445
        %v450 = vld [vmem:[#allocation2] sm:$0xff]
        %v451 = vld [vmem:[#allocation2 + $0x8] sm:$0xff]
        %v452 = vld [vmem:[#allocation2 + $0x10] sm:$0xff]
        %v453 = vld [vmem:[#allocation2 + $0x18] sm:$0xff]
        %v454 = vld [vmem:[#allocation2 + $0x20] sm:$0xff]
        %v455 = vld [vmem:[#allocation2 + $0x28] sm:$0xff]
        %v456 = vld [vmem:[#allocation2 + $0x30] sm:$0xff]
        %v457 = vld [vmem:[#allocation2 + $0x38] sm:$0xff]
        %v458 = vld [vmem:[#allocation2 + $0x40] sm:$0xff]
        %v459 = vld [vmem:[#allocation2 + $0x48] sm:$0xff]
        %v460 = vld [vmem:[#allocation2 + $0x50] sm:$0xff]
        %v461 = vld [vmem:[#allocation2 + $0x58] sm:$0xff]
        %v462 = vld [vmem:[#allocation2 + $0x60] sm:$0xff]
        %v463 = vld [vmem:[#allocation2 + $0x68] sm:$0xff]
        %v464 = vld [vmem:[#allocation2 + $0x70] sm:$0xff]
        %v465 = vld [vmem:[#allocation2 + $0x78] sm:$0xff]
        %v466 = vld [vmem:[#allocation2 + $0x80] sm:$0xff]
        %v467 = vld [vmem:[#allocation2 + $0x88] sm:$0xff]
        %v468 = vld [vmem:[#allocation2 + $0x90] sm:$0xff]
        %v469 = vld [vmem:[#allocation2 + $0x98] sm:$0xff]
        %v470 = vld [vmem:[#allocation2 + $0xa0] sm:$0xff]
        %v471 = vld [vmem:[#allocation2 + $0xa8] sm:$0xff]
        %v472 = vld [vmem:[#allocation2 + $0xb0] sm:$0xff]
        %v473 = vld [vmem:[#allocation2 + $0xb8] sm:$0xff]
        %v474 = vld [vmem:[%s2] sm:$0x3]
        %v476 = vperm.slane %v474, 0
        %v477 = vperm.slane %v474, 1
        %v504 = vunpack.c.l.b16 %v450
        %v505 = vunpack.c.h.b16 %v450
        %v506 = vunpack.c.l.b16 %v451
        %v507 = vunpack.c.h.b16 %v451
        %v508 = vunpack.c.l.b16 %v452
        %v509 = vunpack.c.h.b16 %v452
        %v510 = vunpack.c.l.b16 %v453
        %v511 = vunpack.c.h.b16 %v453
        %v512 = vunpack.c.l.b16 %v454
        %v513 = vunpack.c.h.b16 %v454
        %v514 = vunpack.c.l.b16 %v455
        %v515 = vunpack.c.h.b16 %v455
        %v516 = vunpack.c.l.b16 %v456
        %v517 = vunpack.c.h.b16 %v456
        %v518 = vunpack.c.l.b16 %v457
        %v519 = vunpack.c.h.b16 %v457
        %v520 = vunpack.c.l.b16 %v458
        %v521 = vunpack.c.h.b16 %v458
        %v522 = vunpack.c.l.b16 %v459
        %v523 = vunpack.c.h.b16 %v459
        %v524 = vunpack.c.l.b16 %v460
        %v525 = vunpack.c.h.b16 %v460
        %v526 = vunpack.c.l.b16 %v461
        %v527 = vunpack.c.h.b16 %v461
        %v528 = vunpack.c.l.b16 %v462
        %v529 = vunpack.c.h.b16 %v462
        %v530 = vunpack.c.l.b16 %v463
        %v531 = vunpack.c.h.b16 %v463
        %v532 = vunpack.c.l.b16 %v464
        %v533 = vunpack.c.h.b16 %v464
        %v534 = vunpack.c.l.b16 %v465
        %v535 = vunpack.c.h.b16 %v465
        %v536 = vunpack.c.l.b16 %v466
        %v537 = vunpack.c.h.b16 %v466
        %v538 = vunpack.c.l.b16 %v467
        %v539 = vunpack.c.h.b16 %v467
        %v540 = vunpack.c.l.b16 %v468
        %v541 = vunpack.c.h.b16 %v468
        %v542 = vunpack.c.l.b16 %v469
        %v543 = vunpack.c.h.b16 %v469
        %v544 = vunpack.c.l.b16 %v470
        %v545 = vunpack.c.h.b16 %v470
        %v546 = vunpack.c.l.b16 %v471
        %v547 = vunpack.c.h.b16 %v471
        %v548 = vunpack.c.l.b16 %v472
        %v549 = vunpack.c.h.b16 %v472
        %v550 = vunpack.c.l.b16 %v473
        %v551 = vunpack.c.h.b16 %v473
        %v552 = vpack.c.b16 %v506, %v504
        %v553 = vpack.c.b16 %v507, %v505
        %v554 = vpack.c.b16 %v510, %v508
        %v555 = vpack.c.b16 %v511, %v509
        %v556 = vpack.c.b16 %v514, %v512
        %v557 = vpack.c.b16 %v515, %v513
        %v558 = vpack.c.b16 %v518, %v516
        %v559 = vpack.c.b16 %v519, %v517
        %v560 = vpack.c.b16 %v522, %v520
        %v561 = vpack.c.b16 %v523, %v521
        %v562 = vpack.c.b16 %v526, %v524
        %v563 = vpack.c.b16 %v527, %v525
        %v564 = vpack.c.b16 %v530, %v528
        %v565 = vpack.c.b16 %v531, %v529
        %v566 = vpack.c.b16 %v534, %v532
        %v567 = vpack.c.b16 %v535, %v533
        %v568 = vpack.c.b16 %v538, %v536
        %v569 = vpack.c.b16 %v539, %v537
        %v570 = vpack.c.b16 %v542, %v540
        %v571 = vpack.c.b16 %v543, %v541
        %v572 = vpack.c.b16 %v546, %v544
        %v573 = vpack.c.b16 %v547, %v545
        %v574 = vpack.c.b16 %v550, %v548
        %v575 = vpack.c.b16 %v551, %v549
        %vm600 = vcmask 523264
        %v602 = vsel %vm600, %v449, 0
        %604 = vmatpush.bf16.msra.mxu0 %v566
        %605 = vmatpush.bf16.msra.mxu0 %v564
        %606 = vmatpush.bf16.msra.mxu0 %v562
        %607 = vmatpush.bf16.msra.mxu0 %v560
        %608 = vmatpush.bf16.msra.mxu0 %v558
        %609 = vmatpush.bf16.msra.mxu0 %v556
        %610 = vmatpush.bf16.msra.mxu0 %v554
        %611 = vmatpush.bf16.msra.mxu0 %v552
        %612 = vmatmul.bf16.gmra.mxu0 %v448
        %v613 = vpop.f32.mrf.mxu0
        %v614 = vadd.f32 %v476, %v613
        %v615 = vpop.f32.mrf.mxu0
        %v616 = vadd.f32 %v476, %v615
        %617 = vdwg.mxu0
        %618 = vmatpush.bf16.msra.mxu0 0
        %619 = vmatpush.bf16.msra.mxu0 0
        %620 = vmatpush.bf16.msra.mxu0 0
        %621 = vmatpush.bf16.msra.mxu0 0
        %622 = vmatpush.bf16.msra.mxu0 %v574
        %623 = vmatpush.bf16.msra.mxu0 %v572
        %624 = vmatpush.bf16.msra.mxu0 %v570
        %625 = vmatpush.bf16.msra.mxu0 %v568
        %626 = vmatmul.bf16.gmra.mxu0 %v602
        %v627 = vpop.f32.mrf.mxu0
        %v628 = vadd.f32 %v614, %v627
        %v629 = vpop.f32.mrf.mxu0
        %v630 = vadd.f32 %v616, %v629
        %631 = vdwg.mxu0
        %632 = vmatpush.bf16.msra.mxu0 %v567
        %633 = vmatpush.bf16.msra.mxu0 %v565
        %634 = vmatpush.bf16.msra.mxu0 %v563
        %635 = vmatpush.bf16.msra.mxu0 %v561
        %636 = vmatpush.bf16.msra.mxu0 %v559
        %637 = vmatpush.bf16.msra.mxu0 %v557
        %638 = vmatpush.bf16.msra.mxu0 %v555
        %639 = vmatpush.bf16.msra.mxu0 %v553
        %640 = vmatmul.bf16.gmra.mxu0 %v448
        %v641 = vpop.f32.mrf.mxu0
        %v642 = vadd.f32 %v477, %v641
        %v643 = vpop.f32.mrf.mxu0
        %v644 = vadd.f32 %v477, %v643
        %645 = vdwg.mxu0
        %646 = vmatpush.bf16.msra.mxu0 0
        %647 = vmatpush.bf16.msra.mxu0 0
        %648 = vmatpush.bf16.msra.mxu0 0
        %649 = vmatpush.bf16.msra.mxu0 0
        %650 = vmatpush.bf16.msra.mxu0 %v575
        %651 = vmatpush.bf16.msra.mxu0 %v573
        %652 = vmatpush.bf16.msra.mxu0 %v571
        %653 = vmatpush.bf16.msra.mxu0 %v569
        %654 = vmatmul.bf16.gmra.mxu0 %v602
        %v655 = vpop.f32.mrf.mxu0
        %v656 = vadd.f32 %v642, %v655
        %v657 = vpop.f32.mrf.mxu0
        %v658 = vadd.f32 %v644, %v657
        %659 = vdwg.mxu0
        %v660 = vmax.f32 %v628, 0.0
        %v661 = vmax.f32 %v656, 0.0
        %v662 = vmax.f32 %v630, 0.0
        %v663 = vmax.f32 %v658, 0.0
        %v664 = vpack.c.bf16 %v662, %v660
        %v665 = vpack.c.bf16 %v663, %v661
        %v666 = vld [vmem:[#allocation4] sm:$0xff]
        %v667 = vld [vmem:[#allocation4 + $0x8] sm:$0xff]
        %v668 = vld [vmem:[#allocation4 + $0x10] sm:$0xff]
        %v669 = vld [vmem:[#allocation4 + $0x18] sm:$0xff]
        %v670 = vld [vmem:[#allocation4 + $0x20] sm:$0xff]
        %v671 = vld [vmem:[#allocation4 + $0x28] sm:$0xff]
        %v672 = vld [vmem:[#allocation4 + $0x30] sm:$0xff]
        %v673 = vld [vmem:[#allocation4 + $0x38] sm:$0xff]
        %v674 = vld [vmem:[#allocation4 + $0x40] sm:$0xff]
        %v675 = vld [vmem:[#allocation4 + $0x48] sm:$0xff]
        %v676 = vld [vmem:[#allocation4 + $0x50] sm:$0xff]
        %v677 = vld [vmem:[#allocation4 + $0x58] sm:$0xff]
        %v678 = vld [vmem:[#allocation4 + $0x60] sm:$0xff]
        %v679 = vld [vmem:[#allocation4 + $0x68] sm:$0xff]
        %v680 = vld [vmem:[#allocation4 + $0x70] sm:$0xff]
        %v681 = vld [vmem:[#allocation4 + $0x78] sm:$0xff]
        %v682 = vld [vmem:[#allocation4 + $0x80] sm:$0xff]
        %v683 = vld [vmem:[#allocation4 + $0x88] sm:$0xff]
        %v684 = vld [vmem:[#allocation4 + $0x90] sm:$0xff]
        %v685 = vld [vmem:[#allocation4 + $0x98] sm:$0xff]
        %v686 = vld [vmem:[#allocation4 + $0xa0] sm:$0xff]
        %v687 = vld [vmem:[#allocation4 + $0xa8] sm:$0xff]
        %v688 = vld [vmem:[#allocation4 + $0xb0] sm:$0xff]
        %v689 = vld [vmem:[#allocation4 + $0xb8] sm:$0xff]
        %v690 = vld [vmem:[#allocation4 + $0xc0] sm:$0xff]
        %v691 = vld [vmem:[#allocation4 + $0xc8] sm:$0xff]
        %v692 = vld [vmem:[#allocation4 + $0xd0] sm:$0xff]
        %v693 = vld [vmem:[#allocation4 + $0xd8] sm:$0xff]
        %v694 = vld [vmem:[#allocation4 + $0xe0] sm:$0xff]
        %v695 = vld [vmem:[#allocation4 + $0xe8] sm:$0xff]
        %v696 = vld [vmem:[#allocation4 + $0xf0] sm:$0xff]
        %v697 = vld [vmem:[#allocation4 + $0xf8] sm:$0xff]
        %v698 = vld [vmem:[%s4] sm:$0x3]
        %v700 = vperm.slane %v698, 0
        %v701 = vperm.slane %v698, 1
        %v736 = vunpack.c.l.b16 %v666
        %v737 = vunpack.c.h.b16 %v666
        %v738 = vunpack.c.l.b16 %v667
        %v739 = vunpack.c.h.b16 %v667
        %v740 = vunpack.c.l.b16 %v668
        %v741 = vunpack.c.h.b16 %v668
        %v742 = vunpack.c.l.b16 %v669
        %v743 = vunpack.c.h.b16 %v669
        %v744 = vunpack.c.l.b16 %v670
        %v745 = vunpack.c.h.b16 %v670
        %v746 = vunpack.c.l.b16 %v671
        %v747 = vunpack.c.h.b16 %v671
        %v748 = vunpack.c.l.b16 %v672
        %v749 = vunpack.c.h.b16 %v672
        %v750 = vunpack.c.l.b16 %v673
        %v751 = vunpack.c.h.b16 %v673
        %v752 = vunpack.c.l.b16 %v674
        %v753 = vunpack.c.h.b16 %v674
        %v754 = vunpack.c.l.b16 %v675
        %v755 = vunpack.c.h.b16 %v675
        %v756 = vunpack.c.l.b16 %v676
        %v757 = vunpack.c.h.b16 %v676
        %v758 = vunpack.c.l.b16 %v677
        %v759 = vunpack.c.h.b16 %v677
        %v760 = vunpack.c.l.b16 %v678
        %v761 = vunpack.c.h.b16 %v678
        %v762 = vunpack.c.l.b16 %v679
        %v763 = vunpack.c.h.b16 %v679
        %v764 = vunpack.c.l.b16 %v680
        %v765 = vunpack.c.h.b16 %v680
        %v766 = vunpack.c.l.b16 %v681
        %v767 = vunpack.c.h.b16 %v681
        %v768 = vunpack.c.l.b16 %v682
        %v769 = vunpack.c.h.b16 %v682
        %v770 = vunpack.c.l.b16 %v683
        %v771 = vunpack.c.h.b16 %v683
        %v772 = vunpack.c.l.b16 %v684
        %v773 = vunpack.c.h.b16 %v684
        %v774 = vunpack.c.l.b16 %v685
        %v775 = vunpack.c.h.b16 %v685
        %v776 = vunpack.c.l.b16 %v686
        %v777 = vunpack.c.h.b16 %v686
        %v778 = vunpack.c.l.b16 %v687
        %v779 = vunpack.c.h.b16 %v687
        %v780 = vunpack.c.l.b16 %v688
        %v781 = vunpack.c.h.b16 %v688
        %v782 = vunpack.c.l.b16 %v689
        %v783 = vunpack.c.h.b16 %v689
        %v784 = vunpack.c.l.b16 %v690
        %v785 = vunpack.c.h.b16 %v690
        %v786 = vunpack.c.l.b16 %v691
        %v787 = vunpack.c.h.b16 %v691
        %v788 = vunpack.c.l.b16 %v692
        %v789 = vunpack.c.h.b16 %v692
        %v790 = vunpack.c.l.b16 %v693
        %v791 = vunpack.c.h.b16 %v693
        %v792 = vunpack.c.l.b16 %v694
        %v793 = vunpack.c.h.b16 %v694
        %v794 = vunpack.c.l.b16 %v695
        %v795 = vunpack.c.h.b16 %v695
        %v796 = vunpack.c.l.b16 %v696
        %v797 = vunpack.c.h.b16 %v696
        %v798 = vunpack.c.l.b16 %v697
        %v799 = vunpack.c.h.b16 %v697
        %v800 = vpack.c.b16 %v738, %v736
        %v801 = vpack.c.b16 %v739, %v737
        %v802 = vpack.c.b16 %v742, %v740
        %v803 = vpack.c.b16 %v743, %v741
        %v804 = vpack.c.b16 %v746, %v744
        %v805 = vpack.c.b16 %v747, %v745
        %v806 = vpack.c.b16 %v750, %v748
        %v807 = vpack.c.b16 %v751, %v749
        %v808 = vpack.c.b16 %v754, %v752
        %v809 = vpack.c.b16 %v755, %v753
        %v810 = vpack.c.b16 %v758, %v756
        %v811 = vpack.c.b16 %v759, %v757
        %v812 = vpack.c.b16 %v762, %v760
        %v813 = vpack.c.b16 %v763, %v761
        %v814 = vpack.c.b16 %v766, %v764
        %v815 = vpack.c.b16 %v767, %v765
        %v816 = vpack.c.b16 %v770, %v768
        %v817 = vpack.c.b16 %v771, %v769
        %v818 = vpack.c.b16 %v774, %v772
        %v819 = vpack.c.b16 %v775, %v773
        %v820 = vpack.c.b16 %v778, %v776
        %v821 = vpack.c.b16 %v779, %v777
        %v822 = vpack.c.b16 %v782, %v780
        %v823 = vpack.c.b16 %v783, %v781
        %v824 = vpack.c.b16 %v786, %v784
        %v825 = vpack.c.b16 %v787, %v785
        %v826 = vpack.c.b16 %v790, %v788
        %v827 = vpack.c.b16 %v791, %v789
        %v828 = vpack.c.b16 %v794, %v792
        %v829 = vpack.c.b16 %v795, %v793
        %v830 = vpack.c.b16 %v798, %v796
        %v831 = vpack.c.b16 %v799, %v797
        %864 = vmatpush.bf16.msra.mxu0 %v814
        %865 = vmatpush.bf16.msra.mxu0 %v812
        %866 = vmatpush.bf16.msra.mxu0 %v810
        %867 = vmatpush.bf16.msra.mxu0 %v808
        %868 = vmatpush.bf16.msra.mxu0 %v806
        %869 = vmatpush.bf16.msra.mxu0 %v804
        %870 = vmatpush.bf16.msra.mxu0 %v802
        %871 = vmatpush.bf16.msra.mxu0 %v800
        %872 = vmatmul.bf16.gmra.mxu0 %v664
        %v873 = vpop.f32.mrf.mxu0
        %v874 = vadd.f32 %v700, %v873
        %v875 = vpop.f32.mrf.mxu0
        %v876 = vadd.f32 %v700, %v875
        %877 = vdwg.mxu0
        %878 = vmatpush.bf16.msra.mxu0 %v830
        %879 = vmatpush.bf16.msra.mxu0 %v828
        %880 = vmatpush.bf16.msra.mxu0 %v826
        %881 = vmatpush.bf16.msra.mxu0 %v824
        %882 = vmatpush.bf16.msra.mxu0 %v822
        %883 = vmatpush.bf16.msra.mxu0 %v820
        %884 = vmatpush.bf16.msra.mxu0 %v818
        %885 = vmatpush.bf16.msra.mxu0 %v816
        %886 = vmatmul.bf16.gmra.mxu0 %v665
        %v887 = vpop.f32.mrf.mxu0
        %v888 = vadd.f32 %v874, %v887
        %v889 = vpop.f32.mrf.mxu0
        %v890 = vadd.f32 %v876, %v889
        %891 = vdwg.mxu0
        %892 = vmatpush.bf16.msra.mxu0 %v815
        %893 = vmatpush.bf16.msra.mxu0 %v813
        %894 = vmatpush.bf16.msra.mxu0 %v811
        %895 = vmatpush.bf16.msra.mxu0 %v809
        %896 = vmatpush.bf16.msra.mxu0 %v807
        %897 = vmatpush.bf16.msra.mxu0 %v805
        %898 = vmatpush.bf16.msra.mxu0 %v803
        %899 = vmatpush.bf16.msra.mxu0 %v801
        %900 = vmatmul.bf16.gmra.mxu0 %v664
        %v901 = vpop.f32.mrf.mxu0
        %v902 = vadd.f32 %v701, %v901
        %v903 = vpop.f32.mrf.mxu0
        %v904 = vadd.f32 %v701, %v903
        %905 = vdwg.mxu0
        %906 = vmatpush.bf16.msra.mxu0 %v831
        %907 = vmatpush.bf16.msra.mxu0 %v829
        %908 = vmatpush.bf16.msra.mxu0 %v827
        %909 = vmatpush.bf16.msra.mxu0 %v825
        %910 = vmatpush.bf16.msra.mxu0 %v823
        %911 = vmatpush.bf16.msra.mxu0 %v821
        %912 = vmatpush.bf16.msra.mxu0 %v819
        %913 = vmatpush.bf16.msra.mxu0 %v817
        %914 = vmatmul.bf16.gmra.mxu0 %v665
        %v915 = vpop.f32.mrf.mxu0
        %v916 = vadd.f32 %v902, %v915
        %v917 = vpop.f32.mrf.mxu0
        %v918 = vadd.f32 %v904, %v917
        %919 = vdwg.mxu0
        %v920 = vmax.f32 %v888, 0.0
        %v921 = vmax.f32 %v916, 0.0
        %v922 = vmax.f32 %v890, 0.0
        %v923 = vmax.f32 %v918, 0.0
        %v924 = vpack.c.bf16 %v922, %v920
        %v925 = vpack.c.bf16 %v923, %v921
        %v926 = vld [vmem:[%s5] sm:$0xff]
        %v927 = vld [vmem:[%s5 + $0x8] sm:$0xff]
        %v928 = vld [vmem:[%s5 + $0x10] sm:$0xff]
        %v929 = vld [vmem:[%s5 + $0x18] sm:$0xff]
        %v930 = vld [vmem:[%s5 + $0x20] sm:$0xff]
        %v931 = vld [vmem:[%s5 + $0x28] sm:$0xff]
        %v932 = vld [vmem:[%s5 + $0x30] sm:$0xff]
        %v933 = vld [vmem:[%s5 + $0x38] sm:$0xff]
        %v934 = vld [vmem:[%s5 + $0x40] sm:$0xff]
        %v935 = vld [vmem:[%s5 + $0x48] sm:$0xff]
        %v936 = vld [vmem:[%s5 + $0x50] sm:$0xff]
        %v937 = vld [vmem:[%s5 + $0x58] sm:$0xff]
        %v938 = vld [vmem:[%s5 + $0x60] sm:$0xff]
        %v939 = vld [vmem:[%s5 + $0x68] sm:$0xff]
        %v940 = vld [vmem:[%s5 + $0x70] sm:$0xff]
        %v941 = vld [vmem:[%s5 + $0x78] sm:$0xff]
        %v942 = vld [vmem:[%s5 + $0x80] sm:$0xff]
        %v943 = vld [vmem:[%s5 + $0x88] sm:$0xff]
        %v944 = vld [vmem:[%s5 + $0x90] sm:$0xff]
        %v945 = vld [vmem:[%s5 + $0x98] sm:$0xff]
        %v946 = vld [vmem:[%s5 + $0xa0] sm:$0xff]
        %v947 = vld [vmem:[%s5 + $0xa8] sm:$0xff]
        %v948 = vld [vmem:[%s5 + $0xb0] sm:$0xff]
        %v949 = vld [vmem:[%s5 + $0xb8] sm:$0xff]
        %v950 = vld [vmem:[%s5 + $0xc0] sm:$0xff]
        %v951 = vld [vmem:[%s5 + $0xc8] sm:$0xff]
        %v952 = vld [vmem:[%s5 + $0xd0] sm:$0xff]
        %v953 = vld [vmem:[%s5 + $0xd8] sm:$0xff]
        %v954 = vld [vmem:[%s5 + $0xe0] sm:$0xff]
        %v955 = vld [vmem:[%s5 + $0xe8] sm:$0xff]
        %v956 = vld [vmem:[%s5 + $0xf0] sm:$0xff]
        %v957 = vld [vmem:[%s5 + $0xf8] sm:$0xff]
        %v958 = vld [vmem:[%s6] sm:$0x3]
        %v960 = vperm.slane %v958, 0
        %v961 = vperm.slane %v958, 1
        %v996 = vunpack.c.l.b16 %v926
        %v997 = vunpack.c.h.b16 %v926
        %v998 = vunpack.c.l.b16 %v927
        %v999 = vunpack.c.h.b16 %v927
        %v1000 = vunpack.c.l.b16 %v928
        %v1001 = vunpack.c.h.b16 %v928
        %v1002 = vunpack.c.l.b16 %v929
        %v1003 = vunpack.c.h.b16 %v929
        %v1004 = vunpack.c.l.b16 %v930
        %v1005 = vunpack.c.h.b16 %v930
        %v1006 = vunpack.c.l.b16 %v931
        %v1007 = vunpack.c.h.b16 %v931
        %v1008 = vunpack.c.l.b16 %v932
        %v1009 = vunpack.c.h.b16 %v932
        %v1010 = vunpack.c.l.b16 %v933
        %v1011 = vunpack.c.h.b16 %v933
        %v1012 = vunpack.c.l.b16 %v934
        %v1013 = vunpack.c.h.b16 %v934
        %v1014 = vunpack.c.l.b16 %v935
        %v1015 = vunpack.c.h.b16 %v935
        %v1016 = vunpack.c.l.b16 %v936
        %v1017 = vunpack.c.h.b16 %v936
        %v1018 = vunpack.c.l.b16 %v937
        %v1019 = vunpack.c.h.b16 %v937
        %v1020 = vunpack.c.l.b16 %v938
        %v1021 = vunpack.c.h.b16 %v938
        %v1022 = vunpack.c.l.b16 %v939
        %v1023 = vunpack.c.h.b16 %v939
        %v1024 = vunpack.c.l.b16 %v940
        %v1025 = vunpack.c.h.b16 %v940
        %v1026 = vunpack.c.l.b16 %v941
        %v1027 = vunpack.c.h.b16 %v941
        %v1028 = vunpack.c.l.b16 %v942
        %v1029 = vunpack.c.h.b16 %v942
        %v1030 = vunpack.c.l.b16 %v943
        %v1031 = vunpack.c.h.b16 %v943
        %v1032 = vunpack.c.l.b16 %v944
        %v1033 = vunpack.c.h.b16 %v944
        %v1034 = vunpack.c.l.b16 %v945
        %v1035 = vunpack.c.h.b16 %v945
        %v1036 = vunpack.c.l.b16 %v946
        %v1037 = vunpack.c.h.b16 %v946
        %v1038 = vunpack.c.l.b16 %v947
        %v1039 = vunpack.c.h.b16 %v947
        %v1040 = vunpack.c.l.b16 %v948
        %v1041 = vunpack.c.h.b16 %v948
        %v1042 = vunpack.c.l.b16 %v949
        %v1043 = vunpack.c.h.b16 %v949
        %v1044 = vunpack.c.l.b16 %v950
        %v1045 = vunpack.c.h.b16 %v950
        %v1046 = vunpack.c.l.b16 %v951
        %v1047 = vunpack.c.h.b16 %v951
        %v1048 = vunpack.c.l.b16 %v952
        %v1049 = vunpack.c.h.b16 %v952
        %v1050 = vunpack.c.l.b16 %v953
        %v1051 = vunpack.c.h.b16 %v953
        %v1052 = vunpack.c.l.b16 %v954
        %v1053 = vunpack.c.h.b16 %v954
        %v1054 = vunpack.c.l.b16 %v955
        %v1055 = vunpack.c.h.b16 %v955
        %v1056 = vunpack.c.l.b16 %v956
        %v1057 = vunpack.c.h.b16 %v956
        %v1058 = vunpack.c.l.b16 %v957
        %v1059 = vunpack.c.h.b16 %v957
        %v1060 = vpack.c.b16 %v998, %v996
        %v1061 = vpack.c.b16 %v999, %v997
        %v1062 = vpack.c.b16 %v1002, %v1000
        %v1063 = vpack.c.b16 %v1003, %v1001
        %v1064 = vpack.c.b16 %v1006, %v1004
        %v1065 = vpack.c.b16 %v1007, %v1005
        %v1066 = vpack.c.b16 %v1010, %v1008
        %v1067 = vpack.c.b16 %v1011, %v1009
        %v1068 = vpack.c.b16 %v1014, %v1012
        %v1069 = vpack.c.b16 %v1015, %v1013
        %v1070 = vpack.c.b16 %v1018, %v1016
        %v1071 = vpack.c.b16 %v1019, %v1017
        %v1072 = vpack.c.b16 %v1022, %v1020
        %v1073 = vpack.c.b16 %v1023, %v1021
        %v1074 = vpack.c.b16 %v1026, %v1024
        %v1075 = vpack.c.b16 %v1027, %v1025
        %v1076 = vpack.c.b16 %v1030, %v1028
        %v1077 = vpack.c.b16 %v1031, %v1029
        %v1078 = vpack.c.b16 %v1034, %v1032
        %v1079 = vpack.c.b16 %v1035, %v1033
        %v1080 = vpack.c.b16 %v1038, %v1036
        %v1081 = vpack.c.b16 %v1039, %v1037
        %v1082 = vpack.c.b16 %v1042, %v1040
        %v1083 = vpack.c.b16 %v1043, %v1041
        %v1084 = vpack.c.b16 %v1046, %v1044
        %v1085 = vpack.c.b16 %v1047, %v1045
        %v1086 = vpack.c.b16 %v1050, %v1048
        %v1087 = vpack.c.b16 %v1051, %v1049
        %v1088 = vpack.c.b16 %v1054, %v1052
        %v1089 = vpack.c.b16 %v1055, %v1053
        %v1090 = vpack.c.b16 %v1058, %v1056
        %v1091 = vpack.c.b16 %v1059, %v1057
        %1124 = vmatpush.bf16.msra.mxu0 %v1074
        %1125 = vmatpush.bf16.msra.mxu0 %v1072
        %1126 = vmatpush.bf16.msra.mxu0 %v1070
        %1127 = vmatpush.bf16.msra.mxu0 %v1068
        %1128 = vmatpush.bf16.msra.mxu0 %v1066
        %1129 = vmatpush.bf16.msra.mxu0 %v1064
        %1130 = vmatpush.bf16.msra.mxu0 %v1062
        %1131 = vmatpush.bf16.msra.mxu0 %v1060
        %1132 = vmatmul.bf16.gmra.mxu0 %v924
        %v1133 = vpop.f32.mrf.mxu0
        %v1134 = vadd.f32 %v960, %v1133
        %v1135 = vpop.f32.mrf.mxu0
        %v1136 = vadd.f32 %v960, %v1135
        %1137 = vdwg.mxu0
        %1138 = vmatpush.bf16.msra.mxu0 %v1090
        %1139 = vmatpush.bf16.msra.mxu0 %v1088
        %1140 = vmatpush.bf16.msra.mxu0 %v1086
        %1141 = vmatpush.bf16.msra.mxu0 %v1084
        %1142 = vmatpush.bf16.msra.mxu0 %v1082
        %1143 = vmatpush.bf16.msra.mxu0 %v1080
        %1144 = vmatpush.bf16.msra.mxu0 %v1078
        %1145 = vmatpush.bf16.msra.mxu0 %v1076
        %1146 = vmatmul.bf16.gmra.mxu0 %v925
        %v1147 = vpop.f32.mrf.mxu0
        %v1148 = vadd.f32 %v1134, %v1147
        %v1149 = vpop.f32.mrf.mxu0
        %v1150 = vadd.f32 %v1136, %v1149
        %1151 = vdwg.mxu0
        %1152 = vmatpush.bf16.msra.mxu0 %v1075
        %1153 = vmatpush.bf16.msra.mxu0 %v1073
        %1154 = vmatpush.bf16.msra.mxu0 %v1071
        %1155 = vmatpush.bf16.msra.mxu0 %v1069
        %1156 = vmatpush.bf16.msra.mxu0 %v1067
        %1157 = vmatpush.bf16.msra.mxu0 %v1065
        %1158 = vmatpush.bf16.msra.mxu0 %v1063
        %1159 = vmatpush.bf16.msra.mxu0 %v1061
        %1160 = vmatmul.bf16.gmra.mxu0 %v924
        %v1161 = vpop.f32.mrf.mxu0
        %v1162 = vadd.f32 %v961, %v1161
        %v1163 = vpop.f32.mrf.mxu0
        %v1164 = vadd.f32 %v961, %v1163
        %1165 = vdwg.mxu0
        %1166 = vmatpush.bf16.msra.mxu0 %v1091
        %1167 = vmatpush.bf16.msra.mxu0 %v1089
        %1168 = vmatpush.bf16.msra.mxu0 %v1087
        %1169 = vmatpush.bf16.msra.mxu0 %v1085
        %1170 = vmatpush.bf16.msra.mxu0 %v1083
        %1171 = vmatpush.bf16.msra.mxu0 %v1081
        %1172 = vmatpush.bf16.msra.mxu0 %v1079
        %1173 = vmatpush.bf16.msra.mxu0 %v1077
        %1174 = vmatmul.bf16.gmra.mxu0 %v925
        %v1175 = vpop.f32.mrf.mxu0
        %v1176 = vadd.f32 %v1162, %v1175
        %v1177 = vpop.f32.mrf.mxu0
        %v1178 = vadd.f32 %v1164, %v1177
        %1179 = vdwg.mxu0
        %v1180 = vmax.f32 %v1148, 0.0
        %v1181 = vmax.f32 %v1176, 0.0
        %v1182 = vmax.f32 %v1150, 0.0
        %v1183 = vmax.f32 %v1178, 0.0
        %v1184 = vpack.c.bf16 %v1182, %v1180
        %v1185 = vpack.c.bf16 %v1183, %v1181
        %v1186 = vld [vmem:[%s7] sm:$0xff]
        %v1187 = vld [vmem:[%s7 + $0x8] sm:$0xff]
        %v1188 = vld [vmem:[%s7 + $0x10] sm:$0xf]
        %v1189 = vld [vmem:[%s7 + $0x14] sm:$0xff]
        %v1190 = vld [vmem:[%s7 + $0x1c] sm:$0xff]
        %v1191 = vld [vmem:[%s7 + $0x24] sm:$0xf]
        %v1192 = vld [vmem:[%s7 + $0x28] sm:$0xff]
        %v1193 = vld [vmem:[%s7 + $0x30] sm:$0xff]
        %v1194 = vld [vmem:[%s7 + $0x38] sm:$0xf]
        %v1195 = vld [vmem:[%s7 + $0x3c] sm:$0xff]
        %v1196 = vld [vmem:[%s7 + $0x44] sm:$0xff]
        %v1197 = vld [vmem:[%s7 + $0x4c] sm:$0xf]
        %v1198 = vld [vmem:[%s7 + $0x50] sm:$0xff]
        %v1199 = vld [vmem:[%s7 + $0x58] sm:$0xff]
        %v1200 = vld [vmem:[%s7 + $0x60] sm:$0xf]
        %v1201 = vld [vmem:[%s7 + $0x64] sm:$0xff]
        %v1202 = vld [vmem:[%s7 + $0x6c] sm:$0xff]
        %v1203 = vld [vmem:[%s7 + $0x74] sm:$0xf]
        %v1204 = vld [vmem:[%s7 + $0x78] sm:$0xff]
        %v1205 = vld [vmem:[%s7 + $0x80] sm:$0xff]
        %v1206 = vld [vmem:[%s7 + $0x88] sm:$0xf]
        %v1207 = vld [vmem:[%s7 + $0x8c] sm:$0xff]
        %v1208 = vld [vmem:[%s7 + $0x94] sm:$0xff]
        %v1209 = vld [vmem:[%s7 + $0x9c] sm:$0xf]
        %v1210 = vld [vmem:[%s7 + $0xa0] sm:$0xff]
        %v1211 = vld [vmem:[%s7 + $0xa8] sm:$0xff]
        %v1212 = vld [vmem:[%s7 + $0xb0] sm:$0xf]
        %v1213 = vld [vmem:[%s7 + $0xb4] sm:$0xff]
        %v1214 = vld [vmem:[%s7 + $0xbc] sm:$0xff]
        %v1215 = vld [vmem:[%s7 + $0xc4] sm:$0xf]
        %v1216 = vld [vmem:[%s7 + $0xc8] sm:$0xff]
        %v1217 = vld [vmem:[%s7 + $0xd0] sm:$0xff]
        %v1218 = vld [vmem:[%s7 + $0xd8] sm:$0xf]
        %v1219 = vld [vmem:[%s7 + $0xdc] sm:$0xff]
        %v1220 = vld [vmem:[%s7 + $0xe4] sm:$0xff]
        %v1221 = vld [vmem:[%s7 + $0xec] sm:$0xf]
        %v1222 = vld [vmem:[%s7 + $0xf0] sm:$0xff]
        %v1223 = vld [vmem:[%s7 + $0xf8] sm:$0xff]
        %v1224 = vld [vmem:[%s7 + $0x100] sm:$0xf]
        %v1225 = vld [vmem:[%s7 + $0x104] sm:$0xff]
        %v1226 = vld [vmem:[%s7 + $0x10c] sm:$0xff]
        %v1227 = vld [vmem:[%s7 + $0x114] sm:$0xf]
        %v1228 = vld [vmem:[%s7 + $0x118] sm:$0xff]
        %v1229 = vld [vmem:[%s7 + $0x120] sm:$0xff]
        %v1230 = vld [vmem:[%s7 + $0x128] sm:$0xf]
        %v1231 = vld [vmem:[%s7 + $0x12c] sm:$0xff]
        %v1232 = vld [vmem:[%s7 + $0x134] sm:$0xff]
        %v1233 = vld [vmem:[%s7 + $0x13c] sm:$0xf]
        %v1234 = vld [vmem:[%s7 + $0x140] sm:$0xff]
        %v1235 = vld [vmem:[%s7 + $0x148] sm:$0xff]
        %v1236 = vld [vmem:[%s7 + $0x150] sm:$0xf]
        %v1237 = vld [vmem:[%s7 + $0x154] sm:$0xff]
        %v1238 = vld [vmem:[%s7 + $0x15c] sm:$0xff]
        %v1239 = vld [vmem:[%s7 + $0x164] sm:$0xf]
        %v1240 = vld [vmem:[%s7 + $0x168] sm:$0xff]
        %v1241 = vld [vmem:[%s7 + $0x170] sm:$0xff]
        %v1242 = vld [vmem:[%s7 + $0x178] sm:$0xf]
        %v1243 = vld [vmem:[%s7 + $0x17c] sm:$0xff]
        %v1244 = vld [vmem:[%s7 + $0x184] sm:$0xff]
        %v1245 = vld [vmem:[%s7 + $0x18c] sm:$0xf]
        %v1246 = vld [vmem:[%s7 + $0x190] sm:$0xff]
        %v1247 = vld [vmem:[%s7 + $0x198] sm:$0xff]
        %v1248 = vld [vmem:[%s7 + $0x1a0] sm:$0xf]
        %v1249 = vld [vmem:[%s7 + $0x1a4] sm:$0xff]
        %v1250 = vld [vmem:[%s7 + $0x1ac] sm:$0xff]
        %v1251 = vld [vmem:[%s7 + $0x1b4] sm:$0xf]
        %v1252 = vld [vmem:[%s7 + $0x1b8] sm:$0xff]
        %v1253 = vld [vmem:[%s7 + $0x1c0] sm:$0xff]
        %v1254 = vld [vmem:[%s7 + $0x1c8] sm:$0xf]
        %v1255 = vld [vmem:[%s7 + $0x1cc] sm:$0xff]
        %v1256 = vld [vmem:[%s7 + $0x1d4] sm:$0xff]
        %v1257 = vld [vmem:[%s7 + $0x1dc] sm:$0xf]
        %v1258 = vld [vmem:[%s8] sm:$0x1f]
        %v1260 = vperm.slane %v1258, 0
        %v1261 = vperm.slane %v1258, 1
        %v1262 = vperm.slane %v1258, 2
        %v1263 = vperm.slane %v1258, 3
        %v1264 = vperm.slane %v1258, 4
        %v1342 = vunpack.c.l.b16 %v1186
        %v1343 = vunpack.c.h.b16 %v1186
        %v1344 = vunpack.c.l.b16 %v1187
        %v1345 = vunpack.c.h.b16 %v1187
        %v1346 = vunpack.c.l.b16 %v1188
        %v1347 = vunpack.c.l.b16 %v1189
        %v1348 = vunpack.c.h.b16 %v1189
        %v1349 = vunpack.c.l.b16 %v1190
        %v1350 = vunpack.c.h.b16 %v1190
        %v1351 = vunpack.c.l.b16 %v1191
        %v1352 = vunpack.c.l.b16 %v1192
        %v1353 = vunpack.c.h.b16 %v1192
        %v1354 = vunpack.c.l.b16 %v1193
        %v1355 = vunpack.c.h.b16 %v1193
        %v1356 = vunpack.c.l.b16 %v1194
        %v1357 = vunpack.c.l.b16 %v1195
        %v1358 = vunpack.c.h.b16 %v1195
        %v1359 = vunpack.c.l.b16 %v1196
        %v1360 = vunpack.c.h.b16 %v1196
        %v1361 = vunpack.c.l.b16 %v1197
        %v1362 = vunpack.c.l.b16 %v1198
        %v1363 = vunpack.c.h.b16 %v1198
        %v1364 = vunpack.c.l.b16 %v1199
        %v1365 = vunpack.c.h.b16 %v1199
        %v1366 = vunpack.c.l.b16 %v1200
        %v1367 = vunpack.c.l.b16 %v1201
        %v1368 = vunpack.c.h.b16 %v1201
        %v1369 = vunpack.c.l.b16 %v1202
        %v1370 = vunpack.c.h.b16 %v1202
        %v1371 = vunpack.c.l.b16 %v1203
        %v1372 = vunpack.c.l.b16 %v1204
        %v1373 = vunpack.c.h.b16 %v1204
        %v1374 = vunpack.c.l.b16 %v1205
        %v1375 = vunpack.c.h.b16 %v1205
        %v1376 = vunpack.c.l.b16 %v1206
        %v1377 = vunpack.c.l.b16 %v1207
        %v1378 = vunpack.c.h.b16 %v1207
        %v1379 = vunpack.c.l.b16 %v1208
        %v1380 = vunpack.c.h.b16 %v1208
        %v1381 = vunpack.c.l.b16 %v1209
        %v1382 = vunpack.c.l.b16 %v1210
        %v1383 = vunpack.c.h.b16 %v1210
        %v1384 = vunpack.c.l.b16 %v1211
        %v1385 = vunpack.c.h.b16 %v1211
        %v1386 = vunpack.c.l.b16 %v1212
        %v1387 = vunpack.c.l.b16 %v1213
        %v1388 = vunpack.c.h.b16 %v1213
        %v1389 = vunpack.c.l.b16 %v1214
        %v1390 = vunpack.c.h.b16 %v1214
        %v1391 = vunpack.c.l.b16 %v1215
        %v1392 = vunpack.c.l.b16 %v1216
        %v1393 = vunpack.c.h.b16 %v1216
        %v1394 = vunpack.c.l.b16 %v1217
        %v1395 = vunpack.c.h.b16 %v1217
        %v1396 = vunpack.c.l.b16 %v1218
        %v1397 = vunpack.c.l.b16 %v1219
        %v1398 = vunpack.c.h.b16 %v1219
        %v1399 = vunpack.c.l.b16 %v1220
        %v1400 = vunpack.c.h.b16 %v1220
        %v1401 = vunpack.c.l.b16 %v1221
        %v1402 = vunpack.c.l.b16 %v1222
        %v1403 = vunpack.c.h.b16 %v1222
        %v1404 = vunpack.c.l.b16 %v1223
        %v1405 = vunpack.c.h.b16 %v1223
        %v1406 = vunpack.c.l.b16 %v1224
        %v1407 = vunpack.c.l.b16 %v1225
        %v1408 = vunpack.c.h.b16 %v1225
        %v1409 = vunpack.c.l.b16 %v1226
        %v1410 = vunpack.c.h.b16 %v1226
        %v1411 = vunpack.c.l.b16 %v1227
        %v1412 = vunpack.c.l.b16 %v1228
        %v1413 = vunpack.c.h.b16 %v1228
        %v1414 = vunpack.c.l.b16 %v1229
        %v1415 = vunpack.c.h.b16 %v1229
        %v1416 = vunpack.c.l.b16 %v1230
        %v1417 = vunpack.c.l.b16 %v1231
        %v1418 = vunpack.c.h.b16 %v1231
        %v1419 = vunpack.c.l.b16 %v1232
        %v1420 = vunpack.c.h.b16 %v1232
        %v1421 = vunpack.c.l.b16 %v1233
        %v1422 = vunpack.c.l.b16 %v1234
        %v1423 = vunpack.c.h.b16 %v1234
        %v1424 = vunpack.c.l.b16 %v1235
        %v1425 = vunpack.c.h.b16 %v1235
        %v1426 = vunpack.c.l.b16 %v1236
        %v1427 = vunpack.c.l.b16 %v1237
        %v1428 = vunpack.c.h.b16 %v1237
        %v1429 = vunpack.c.l.b16 %v1238
        %v1430 = vunpack.c.h.b16 %v1238
        %v1431 = vunpack.c.l.b16 %v1239
        %v1432 = vunpack.c.l.b16 %v1240
        %v1433 = vunpack.c.h.b16 %v1240
        %v1434 = vunpack.c.l.b16 %v1241
        %v1435 = vunpack.c.h.b16 %v1241
        %v1436 = vunpack.c.l.b16 %v1242
        %v1437 = vunpack.c.l.b16 %v1243
        %v1438 = vunpack.c.h.b16 %v1243
        %v1439 = vunpack.c.l.b16 %v1244
        %v1440 = vunpack.c.h.b16 %v1244
        %v1441 = vunpack.c.l.b16 %v1245
        %v1442 = vunpack.c.l.b16 %v1246
        %v1443 = vunpack.c.h.b16 %v1246
        %v1444 = vunpack.c.l.b16 %v1247
        %v1445 = vunpack.c.h.b16 %v1247
        %v1446 = vunpack.c.l.b16 %v1248
        %v1447 = vunpack.c.l.b16 %v1249
        %v1448 = vunpack.c.h.b16 %v1249
        %v1449 = vunpack.c.l.b16 %v1250
        %v1450 = vunpack.c.h.b16 %v1250
        %v1451 = vunpack.c.l.b16 %v1251
        %v1452 = vunpack.c.l.b16 %v1252
        %v1453 = vunpack.c.h.b16 %v1252
        %v1454 = vunpack.c.l.b16 %v1253
        %v1455 = vunpack.c.h.b16 %v1253
        %v1456 = vunpack.c.l.b16 %v1254
        %v1457 = vunpack.c.l.b16 %v1255
        %v1458 = vunpack.c.h.b16 %v1255
        %v1459 = vunpack.c.l.b16 %v1256
        %v1460 = vunpack.c.h.b16 %v1256
        %v1461 = vunpack.c.l.b16 %v1257
        %v1462 = vpack.c.b16 %v1347, %v1342
        %v1463 = vpack.c.b16 %v1348, %v1343
        %v1464 = vpack.c.b16 %v1349, %v1344
        %v1465 = vpack.c.b16 %v1350, %v1345
        %v1466 = vpack.c.b16 %v1351, %v1346
        %v1467 = vpack.c.b16 %v1357, %v1352
        %v1468 = vpack.c.b16 %v1358, %v1353
        %v1469 = vpack.c.b16 %v1359, %v1354
        %v1470 = vpack.c.b16 %v1360, %v1355
        %v1471 = vpack.c.b16 %v1361, %v1356
        %v1472 = vpack.c.b16 %v1367, %v1362
        %v1473 = vpack.c.b16 %v1368, %v1363
        %v1474 = vpack.c.b16 %v1369, %v1364
        %v1475 = vpack.c.b16 %v1370, %v1365
        %v1476 = vpack.c.b16 %v1371, %v1366
        %v1477 = vpack.c.b16 %v1377, %v1372
        %v1478 = vpack.c.b16 %v1378, %v1373
        %v1479 = vpack.c.b16 %v1379, %v1374
        %v1480 = vpack.c.b16 %v1380, %v1375
        %v1481 = vpack.c.b16 %v1381, %v1376
        %v1482 = vpack.c.b16 %v1387, %v1382
        %v1483 = vpack.c.b16 %v1388, %v1383
        %v1484 = vpack.c.b16 %v1389, %v1384
        %v1485 = vpack.c.b16 %v1390, %v1385
        %v1486 = vpack.c.b16 %v1391, %v1386
        %v1487 = vpack.c.b16 %v1397, %v1392
        %v1488 = vpack.c.b16 %v1398, %v1393
        %v1489 = vpack.c.b16 %v1399, %v1394
        %v1490 = vpack.c.b16 %v1400, %v1395
        %v1491 = vpack.c.b16 %v1401, %v1396
        %v1492 = vpack.c.b16 %v1407, %v1402
        %v1493 = vpack.c.b16 %v1408, %v1403
        %v1494 = vpack.c.b16 %v1409, %v1404
        %v1495 = vpack.c.b16 %v1410, %v1405
        %v1496 = vpack.c.b16 %v1411, %v1406
        %v1497 = vpack.c.b16 %v1417, %v1412
        %v1498 = vpack.c.b16 %v1418, %v1413
        %v1499 = vpack.c.b16 %v1419, %v1414
        %v1500 = vpack.c.b16 %v1420, %v1415
        %v1501 = vpack.c.b16 %v1421, %v1416
        %v1502 = vpack.c.b16 %v1427, %v1422
        %v1503 = vpack.c.b16 %v1428, %v1423
        %v1504 = vpack.c.b16 %v1429, %v1424
        %v1505 = vpack.c.b16 %v1430, %v1425
        %v1506 = vpack.c.b16 %v1431, %v1426
        %v1507 = vpack.c.b16 %v1437, %v1432
        %v1508 = vpack.c.b16 %v1438, %v1433
        %v1509 = vpack.c.b16 %v1439, %v1434
        %v1510 = vpack.c.b16 %v1440, %v1435
        %v1511 = vpack.c.b16 %v1441, %v1436
        %v1512 = vpack.c.b16 %v1447, %v1442
        %v1513 = vpack.c.b16 %v1448, %v1443
        %v1514 = vpack.c.b16 %v1449, %v1444
        %v1515 = vpack.c.b16 %v1450, %v1445
        %v1516 = vpack.c.b16 %v1451, %v1446
        %v1517 = vpack.c.b16 %v1457, %v1452
        %v1518 = vpack.c.b16 %v1458, %v1453
        %v1519 = vpack.c.b16 %v1459, %v1454
        %v1520 = vpack.c.b16 %v1460, %v1455
        %v1521 = vpack.c.b16 %v1461, %v1456
        %v1583 = vsel %vm600, %v1185, 0
        %1585 = vmatpush.bf16.msra.mxu0 %v1497
        %1586 = vmatpush.bf16.msra.mxu0 %v1492
        %1587 = vmatpush.bf16.msra.mxu0 %v1487
        %1588 = vmatpush.bf16.msra.mxu0 %v1482
        %1589 = vmatpush.bf16.msra.mxu0 %v1477
        %1590 = vmatpush.bf16.msra.mxu0 %v1472
        %1591 = vmatpush.bf16.msra.mxu0 %v1467
        %1592 = vmatpush.bf16.msra.mxu0 %v1462
        %1593 = vmatmul.bf16.gmra.mxu0 %v1184
        %v1594 = vpop.f32.mrf.mxu0
        %v1595 = vadd.f32 %v1260, %v1594
        %v1596 = vpop.f32.mrf.mxu0
        %v1597 = vadd.f32 %v1260, %v1596
        %1598 = vdwg.mxu0
        %1599 = vmatpush.bf16.msra.mxu0 0
        %1600 = vmatpush.bf16.msra.mxu0 0
        %1601 = vmatpush.bf16.msra.mxu0 0
        %1602 = vmatpush.bf16.msra.mxu0 0
        %1603 = vmatpush.bf16.msra.mxu0 %v1517
        %1604 = vmatpush.bf16.msra.mxu0 %v1512
        %1605 = vmatpush.bf16.msra.mxu0 %v1507
        %1606 = vmatpush.bf16.msra.mxu0 %v1502
        %1607 = vmatmul.bf16.gmra.mxu0 %v1583
        %v1608 = vpop.f32.mrf.mxu0
        %v1609 = vadd.f32 %v1595, %v1608
        %v1610 = vpop.f32.mrf.mxu0
        %v1611 = vadd.f32 %v1597, %v1610
        %1612 = vdwg.mxu0
        %1613 = vmatpush.bf16.msra.mxu0 %v1498
        %1614 = vmatpush.bf16.msra.mxu0 %v1493
        %1615 = vmatpush.bf16.msra.mxu0 %v1488
        %1616 = vmatpush.bf16.msra.mxu0 %v1483
        %1617 = vmatpush.bf16.msra.mxu0 %v1478
        %1618 = vmatpush.bf16.msra.mxu0 %v1473
        %1619 = vmatpush.bf16.msra.mxu0 %v1468
        %1620 = vmatpush.bf16.msra.mxu0 %v1463
        %1621 = vmatmul.bf16.gmra.mxu0 %v1184
        %v1622 = vpop.f32.mrf.mxu0
        %v1623 = vadd.f32 %v1261, %v1622
        %v1624 = vpop.f32.mrf.mxu0
        %v1625 = vadd.f32 %v1261, %v1624
        %1626 = vdwg.mxu0
        %1627 = vmatpush.bf16.msra.mxu0 0
        %1628 = vmatpush.bf16.msra.mxu0 0
        %1629 = vmatpush.bf16.msra.mxu0 0
        %1630 = vmatpush.bf16.msra.mxu0 0
        %1631 = vmatpush.bf16.msra.mxu0 %v1518
        %1632 = vmatpush.bf16.msra.mxu0 %v1513
        %1633 = vmatpush.bf16.msra.mxu0 %v1508
        %1634 = vmatpush.bf16.msra.mxu0 %v1503
        %1635 = vmatmul.bf16.gmra.mxu0 %v1583
        %v1636 = vpop.f32.mrf.mxu0
        %v1637 = vadd.f32 %v1623, %v1636
        %v1638 = vpop.f32.mrf.mxu0
        %v1639 = vadd.f32 %v1625, %v1638
        %1640 = vdwg.mxu0
        %1641 = vmatpush.bf16.msra.mxu0 %v1499
        %1642 = vmatpush.bf16.msra.mxu0 %v1494
        %1643 = vmatpush.bf16.msra.mxu0 %v1489
        %1644 = vmatpush.bf16.msra.mxu0 %v1484
        %1645 = vmatpush.bf16.msra.mxu0 %v1479
        %1646 = vmatpush.bf16.msra.mxu0 %v1474
        %1647 = vmatpush.bf16.msra.mxu0 %v1469
        %1648 = vmatpush.bf16.msra.mxu0 %v1464
        %1649 = vmatmul.bf16.gmra.mxu0 %v1184
        %v1650 = vpop.f32.mrf.mxu0
        %v1651 = vadd.f32 %v1262, %v1650
        %v1652 = vpop.f32.mrf.mxu0
        %v1653 = vadd.f32 %v1262, %v1652
        %1654 = vdwg.mxu0
        %1655 = vmatpush.bf16.msra.mxu0 0
        %1656 = vmatpush.bf16.msra.mxu0 0
        %1657 = vmatpush.bf16.msra.mxu0 0
        %1658 = vmatpush.bf16.msra.mxu0 0
        %1659 = vmatpush.bf16.msra.mxu0 %v1519
        %1660 = vmatpush.bf16.msra.mxu0 %v1514
        %1661 = vmatpush.bf16.msra.mxu0 %v1509
        %1662 = vmatpush.bf16.msra.mxu0 %v1504
        %1663 = vmatmul.bf16.gmra.mxu0 %v1583
        %v1664 = vpop.f32.mrf.mxu0
        %v1665 = vadd.f32 %v1651, %v1664
        %v1666 = vpop.f32.mrf.mxu0
        %v1667 = vadd.f32 %v1653, %v1666
        %1668 = vdwg.mxu0
        %1669 = vmatpush.bf16.msra.mxu0 %v1500
        %1670 = vmatpush.bf16.msra.mxu0 %v1495
        %1671 = vmatpush.bf16.msra.mxu0 %v1490
        %1672 = vmatpush.bf16.msra.mxu0 %v1485
        %1673 = vmatpush.bf16.msra.mxu0 %v1480
        %1674 = vmatpush.bf16.msra.mxu0 %v1475
        %1675 = vmatpush.bf16.msra.mxu0 %v1470
        %1676 = vmatpush.bf16.msra.mxu0 %v1465
        %1677 = vmatmul.bf16.gmra.mxu0 %v1184
        %v1678 = vpop.f32.mrf.mxu0
        %v1679 = vadd.f32 %v1263, %v1678
        %v1680 = vpop.f32.mrf.mxu0
        %v1681 = vadd.f32 %v1263, %v1680
        %1682 = vdwg.mxu0
        %1683 = vmatpush.bf16.msra.mxu0 0
        %1684 = vmatpush.bf16.msra.mxu0 0
        %1685 = vmatpush.bf16.msra.mxu0 0
        %1686 = vmatpush.bf16.msra.mxu0 0
        %1687 = vmatpush.bf16.msra.mxu0 %v1520
        %1688 = vmatpush.bf16.msra.mxu0 %v1515
        %1689 = vmatpush.bf16.msra.mxu0 %v1510
        %1690 = vmatpush.bf16.msra.mxu0 %v1505
        %1691 = vmatmul.bf16.gmra.mxu0 %v1583
        %v1692 = vpop.f32.mrf.mxu0
        %v1693 = vadd.f32 %v1679, %v1692
        %v1694 = vpop.f32.mrf.mxu0
        %v1695 = vadd.f32 %v1681, %v1694
        %1696 = vdwg.mxu0
        %1697 = vmatpush.bf16.msra.mxu0 %v1501
        %1698 = vmatpush.bf16.msra.mxu0 %v1496
        %1699 = vmatpush.bf16.msra.mxu0 %v1491
        %1700 = vmatpush.bf16.msra.mxu0 %v1486
        %1701 = vmatpush.bf16.msra.mxu0 %v1481
        %1702 = vmatpush.bf16.msra.mxu0 %v1476
        %1703 = vmatpush.bf16.msra.mxu0 %v1471
        %1704 = vmatpush.bf16.msra.mxu0 %v1466
        %1705 = vmatmul.bf16.gmra.mxu0 %v1184
        %v1706 = vpop.f32.mrf.mxu0
        %v1707 = vadd.f32 %v1264, %v1706
        %v1708 = vpop.f32.mrf.mxu0
        %v1709 = vadd.f32 %v1264, %v1708
        %1710 = vdwg.mxu0
        %1711 = vmatpush.bf16.msra.mxu0 0
        %1712 = vmatpush.bf16.msra.mxu0 0
        %1713 = vmatpush.bf16.msra.mxu0 0
        %1714 = vmatpush.bf16.msra.mxu0 0
        %1715 = vmatpush.bf16.msra.mxu0 %v1521
        %1716 = vmatpush.bf16.msra.mxu0 %v1516
        %1717 = vmatpush.bf16.msra.mxu0 %v1511
        %1718 = vmatpush.bf16.msra.mxu0 %v1506
        %1719 = vmatmul.bf16.gmra.mxu0 %v1583
        %v1720 = vpop.f32.mrf.mxu0
        %v1721 = vadd.f32 %v1707, %v1720
        %v1722 = vpop.f32.mrf.mxu0
        %v1723 = vadd.f32 %v1709, %v1722
        %1724 = vdwg.mxu0
        %v1725 = vmax.f32 %v1609, 0.0
        %v1726 = vmax.f32 %v1637, 0.0
        %v1727 = vmax.f32 %v1665, 0.0
        %v1728 = vmax.f32 %v1693, 0.0
        %v1729 = vmax.f32 %v1721, 0.0
        %v1730 = vmax.f32 %v1611, 0.0
        %v1731 = vmax.f32 %v1639, 0.0
        %v1732 = vmax.f32 %v1667, 0.0
        %v1733 = vmax.f32 %v1695, 0.0
        %v1734 = vmax.f32 %v1723, 0.0
        %v1735 = vpack.c.bf16 %v1730, %v1725
        %v1736 = vpack.c.bf16 %v1731, %v1726
        %v1737 = vpack.c.bf16 %v1732, %v1727
        %v1738 = vpack.c.bf16 %v1733, %v1728
        %v1739 = vpack.c.bf16 %v1734, %v1729
        %v1740 = vld [vmem:[#allocation6] sm:$0xf]
        %v1741 = vld [vmem:[#allocation6 + $0x4] sm:$0xf]
        %v1742 = vld [vmem:[#allocation6 + $0x8] sm:$0xf]
        %v1743 = vld [vmem:[#allocation6 + $0xc] sm:$0xf]
        %v1744 = vld [vmem:[#allocation6 + $0x10] sm:$0xf]
        %v1745 = vld [vmem:[#allocation6 + $0x14] sm:$0xf]
        %v1746 = vld [vmem:[#allocation6 + $0x18] sm:$0xf]
        %v1747 = vld [vmem:[#allocation6 + $0x1c] sm:$0xf]
        %v1748 = vld [vmem:[#allocation6 + $0x20] sm:$0xf]
        %v1749 = vld [vmem:[#allocation6 + $0x24] sm:$0xf]
        %v1750 = vld [vmem:[#allocation6 + $0x28] sm:$0xf]
        %v1751 = vld [vmem:[#allocation6 + $0x2c] sm:$0xf]
        %v1752 = vld [vmem:[#allocation6 + $0x30] sm:$0xf]
        %v1753 = vld [vmem:[#allocation6 + $0x34] sm:$0xf]
        %v1754 = vld [vmem:[#allocation6 + $0x38] sm:$0xf]
        %v1755 = vld [vmem:[#allocation6 + $0x3c] sm:$0xf]
        %v1756 = vld [vmem:[#allocation6 + $0x40] sm:$0xf]
        %v1757 = vld [vmem:[#allocation6 + $0x44] sm:$0xf]
        %v1758 = vld [vmem:[#allocation6 + $0x48] sm:$0xf]
        %v1759 = vld [vmem:[#allocation6 + $0x4c] sm:$0xf]
        %v1760 = vld [vmem:[#allocation6 + $0x50] sm:$0xf]
        %v1761 = vld [vmem:[#allocation6 + $0x54] sm:$0xf]
        %v1762 = vld [vmem:[#allocation6 + $0x58] sm:$0xf]
        %v1763 = vld [vmem:[#allocation6 + $0x5c] sm:$0xf]
        %v1764 = vld [vmem:[#allocation6 + $0x60] sm:$0xf]
        %v1765 = vld [vmem:[#allocation6 + $0x64] sm:$0xf]
        %v1766 = vld [vmem:[#allocation6 + $0x68] sm:$0xf]
        %v1767 = vld [vmem:[#allocation6 + $0x6c] sm:$0xf]
        %v1768 = vld [vmem:[#allocation6 + $0x70] sm:$0xf]
        %v1769 = vld [vmem:[#allocation6 + $0x74] sm:$0xf]
        %v1770 = vld [vmem:[#allocation6 + $0x78] sm:$0xf]
        %v1771 = vld [vmem:[#allocation6 + $0x7c] sm:$0xf]
        %v1772 = vld [vmem:[#allocation6 + $0x80] sm:$0xf]
        %v1773 = vld [vmem:[#allocation6 + $0x84] sm:$0xf]
        %v1774 = vld [vmem:[#allocation6 + $0x88] sm:$0xf]
        %v1775 = vld [vmem:[#allocation6 + $0x8c] sm:$0xf]
        %v1776 = vld [vmem:[#allocation6 + $0x90] sm:$0xf]
        %v1777 = vld [vmem:[#allocation6 + $0x94] sm:$0xf]
        %v1778 = vld [vmem:[#allocation6 + $0x98] sm:$0xf]
        %v1779 = vld [vmem:[#allocation6 + $0x9c] sm:$0xf]
        %v1780 = vld [vmem:[#allocation6 + $0xa0] sm:$0xf]
        %v1781 = vld [vmem:[#allocation6 + $0xa4] sm:$0xf]
        %v1782 = vld [vmem:[#allocation6 + $0xa8] sm:$0xf]
        %v1783 = vld [vmem:[#allocation6 + $0xac] sm:$0xf]
        %v1784 = vld [vmem:[#allocation6 + $0xb0] sm:$0xf]
        %v1785 = vld [vmem:[#allocation6 + $0xb4] sm:$0xf]
        %v1786 = vld [vmem:[#allocation6 + $0xb8] sm:$0xf]
        %v1787 = vld [vmem:[#allocation6 + $0xbc] sm:$0xf]
        %v1788 = vld [vmem:[#allocation6 + $0xc0] sm:$0xf]
        %v1789 = vld [vmem:[#allocation6 + $0xc4] sm:$0xf]
        %v1790 = vld [vmem:[#allocation6 + $0xc8] sm:$0xf]
        %v1791 = vld [vmem:[#allocation6 + $0xcc] sm:$0xf]
        %v1792 = vld [vmem:[#allocation6 + $0xd0] sm:$0xf]
        %v1793 = vld [vmem:[#allocation6 + $0xd4] sm:$0xf]
        %v1794 = vld [vmem:[#allocation6 + $0xd8] sm:$0xf]
        %v1795 = vld [vmem:[#allocation6 + $0xdc] sm:$0xf]
        %v1796 = vld [vmem:[#allocation6 + $0xe0] sm:$0xf]
        %v1797 = vld [vmem:[#allocation6 + $0xe4] sm:$0xf]
        %v1798 = vld [vmem:[#allocation6 + $0xe8] sm:$0xf]
        %v1799 = vld [vmem:[#allocation6 + $0xec] sm:$0xf]
        %v1800 = vld [vmem:[#allocation6 + $0xf0] sm:$0xf]
        %v1801 = vld [vmem:[#allocation6 + $0xf4] sm:$0xf]
        %v1802 = vld [vmem:[#allocation6 + $0xf8] sm:$0xf]
        %v1803 = vld [vmem:[#allocation6 + $0xfc] sm:$0xf]
        %v1804 = vld [vmem:[#allocation6 + $0x100] sm:$0xf]
        %v1805 = vld [vmem:[#allocation6 + $0x104] sm:$0xf]
        %v1806 = vld [vmem:[#allocation6 + $0x108] sm:$0xf]
        %v1807 = vld [vmem:[#allocation6 + $0x10c] sm:$0xf]
        %v1808 = vld [vmem:[#allocation6 + $0x110] sm:$0xf]
        %v1809 = vld [vmem:[#allocation6 + $0x114] sm:$0xf]
        %v1810 = vld [vmem:[#allocation6 + $0x118] sm:$0xf]
        %v1811 = vld [vmem:[#allocation6 + $0x11c] sm:$0xf]
        %v1812 = vld [vmem:[%s10] sm:$0x1]
        %v1814 = vperm.slane %v1812, 0
        %v1888 = vunpack.c.l.b16 %v1740
        %v1889 = vunpack.c.l.b16 %v1741
        %v1890 = vunpack.c.l.b16 %v1742
        %v1891 = vunpack.c.l.b16 %v1743
        %v1892 = vunpack.c.l.b16 %v1744
        %v1893 = vunpack.c.l.b16 %v1745
        %v1894 = vunpack.c.l.b16 %v1746
        %v1895 = vunpack.c.l.b16 %v1747
        %v1896 = vunpack.c.l.b16 %v1748
        %v1897 = vunpack.c.l.b16 %v1749
        %v1898 = vunpack.c.l.b16 %v1750
        %v1899 = vunpack.c.l.b16 %v1751
        %v1900 = vunpack.c.l.b16 %v1752
        %v1901 = vunpack.c.l.b16 %v1753
        %v1902 = vunpack.c.l.b16 %v1754
        %v1903 = vunpack.c.l.b16 %v1755
        %v1904 = vunpack.c.l.b16 %v1756
        %v1905 = vunpack.c.l.b16 %v1757
        %v1906 = vunpack.c.l.b16 %v1758
        %v1907 = vunpack.c.l.b16 %v1759
        %v1908 = vunpack.c.l.b16 %v1760
        %v1909 = vunpack.c.l.b16 %v1761
        %v1910 = vunpack.c.l.b16 %v1762
        %v1911 = vunpack.c.l.b16 %v1763
        %v1912 = vunpack.c.l.b16 %v1764
        %v1913 = vunpack.c.l.b16 %v1765
        %v1914 = vunpack.c.l.b16 %v1766
        %v1915 = vunpack.c.l.b16 %v1767
        %v1916 = vunpack.c.l.b16 %v1768
        %v1917 = vunpack.c.l.b16 %v1769
        %v1918 = vunpack.c.l.b16 %v1770
        %v1919 = vunpack.c.l.b16 %v1771
        %v1920 = vunpack.c.l.b16 %v1772
        %v1921 = vunpack.c.l.b16 %v1773
        %v1922 = vunpack.c.l.b16 %v1774
        %v1923 = vunpack.c.l.b16 %v1775
        %v1924 = vunpack.c.l.b16 %v1776
        %v1925 = vunpack.c.l.b16 %v1777
        %v1926 = vunpack.c.l.b16 %v1778
        %v1927 = vunpack.c.l.b16 %v1779
        %v1928 = vunpack.c.l.b16 %v1780
        %v1929 = vunpack.c.l.b16 %v1781
        %v1930 = vunpack.c.l.b16 %v1782
        %v1931 = vunpack.c.l.b16 %v1783
        %v1932 = vunpack.c.l.b16 %v1784
        %v1933 = vunpack.c.l.b16 %v1785
        %v1934 = vunpack.c.l.b16 %v1786
        %v1935 = vunpack.c.l.b16 %v1787
        %v1936 = vunpack.c.l.b16 %v1788
        %v1937 = vunpack.c.l.b16 %v1789
        %v1938 = vunpack.c.l.b16 %v1790
        %v1939 = vunpack.c.l.b16 %v1791
        %v1940 = vunpack.c.l.b16 %v1792
        %v1941 = vunpack.c.l.b16 %v1793
        %v1942 = vunpack.c.l.b16 %v1794
        %v1943 = vunpack.c.l.b16 %v1795
        %v1944 = vunpack.c.l.b16 %v1796
        %v1945 = vunpack.c.l.b16 %v1797
        %v1946 = vunpack.c.l.b16 %v1798
        %v1947 = vunpack.c.l.b16 %v1799
        %v1948 = vunpack.c.l.b16 %v1800
        %v1949 = vunpack.c.l.b16 %v1801
        %v1950 = vunpack.c.l.b16 %v1802
        %v1951 = vunpack.c.l.b16 %v1803
        %v1952 = vunpack.c.l.b16 %v1804
        %v1953 = vunpack.c.l.b16 %v1805
        %v1954 = vunpack.c.l.b16 %v1806
        %v1955 = vunpack.c.l.b16 %v1807
        %v1956 = vunpack.c.l.b16 %v1808
        %v1957 = vunpack.c.l.b16 %v1809
        %v1958 = vunpack.c.l.b16 %v1810
        %v1959 = vunpack.c.l.b16 %v1811
        %v1960 = vpack.c.b16 %v1889, %v1888
        %v1961 = vpack.c.b16 %v1891, %v1890
        %v1962 = vpack.c.b16 %v1893, %v1892
        %v1963 = vpack.c.b16 %v1895, %v1894
        %v1964 = vpack.c.b16 %v1897, %v1896
        %v1965 = vpack.c.b16 %v1899, %v1898
        %v1966 = vpack.c.b16 %v1901, %v1900
        %v1967 = vpack.c.b16 %v1903, %v1902
        %v1968 = vpack.c.b16 %v1905, %v1904
        %v1969 = vpack.c.b16 %v1907, %v1906
        %v1970 = vpack.c.b16 %v1909, %v1908
        %v1971 = vpack.c.b16 %v1911, %v1910
        %v1972 = vpack.c.b16 %v1913, %v1912
        %v1973 = vpack.c.b16 %v1915, %v1914
        %v1974 = vpack.c.b16 %v1917, %v1916
        %v1975 = vpack.c.b16 %v1919, %v1918
        %v1976 = vpack.c.b16 %v1921, %v1920
        %v1977 = vpack.c.b16 %v1923, %v1922
        %v1978 = vpack.c.b16 %v1925, %v1924
        %v1979 = vpack.c.b16 %v1927, %v1926
        %v1980 = vpack.c.b16 %v1929, %v1928
        %v1981 = vpack.c.b16 %v1931, %v1930
        %v1982 = vpack.c.b16 %v1933, %v1932
        %v1983 = vpack.c.b16 %v1935, %v1934
        %v1984 = vpack.c.b16 %v1937, %v1936
        %v1985 = vpack.c.b16 %v1939, %v1938
        %v1986 = vpack.c.b16 %v1941, %v1940
        %v1987 = vpack.c.b16 %v1943, %v1942
        %v1988 = vpack.c.b16 %v1945, %v1944
        %v1989 = vpack.c.b16 %v1947, %v1946
        %v1990 = vpack.c.b16 %v1949, %v1948
        %v1991 = vpack.c.b16 %v1951, %v1950
        %v1992 = vpack.c.b16 %v1953, %v1952
        %v1993 = vpack.c.b16 %v1955, %v1954
        %v1994 = vpack.c.b16 %v1957, %v1956
        %v1995 = vpack.c.b16 %v1959, %v1958
        %v2033 = vsel %vm600, %v1739, 0
        %2035 = vmatpush.bf16.msra.mxu0 %v1967
        %2036 = vmatpush.bf16.msra.mxu0 %v1966
        %2037 = vmatpush.bf16.msra.mxu0 %v1965
        %2038 = vmatpush.bf16.msra.mxu0 %v1964
        %2039 = vmatpush.bf16.msra.mxu0 %v1963
        %2040 = vmatpush.bf16.msra.mxu0 %v1962
        %2041 = vmatpush.bf16.msra.mxu0 %v1961
        %2042 = vmatpush.bf16.msra.mxu0 %v1960
        %2043 = vmatmul.bf16.gmra.mxu0 %v1735
        %v2044 = vpop.f32.mrf.mxu0
        %v2045 = vadd.f32 %v1814, %v2044
        %v2046 = vpop.f32.mrf.mxu0
        %v2047 = vadd.f32 %v1814, %v2046
        %2048 = vdwg.mxu0
        %2049 = vmatpush.bf16.msra.mxu0 %v1975
        %2050 = vmatpush.bf16.msra.mxu0 %v1974
        %2051 = vmatpush.bf16.msra.mxu0 %v1973
        %2052 = vmatpush.bf16.msra.mxu0 %v1972
        %2053 = vmatpush.bf16.msra.mxu0 %v1971
        %2054 = vmatpush.bf16.msra.mxu0 %v1970
        %2055 = vmatpush.bf16.msra.mxu0 %v1969
        %2056 = vmatpush.bf16.msra.mxu0 %v1968
        %2057 = vmatmul.bf16.gmra.mxu0 %v1736
        %v2058 = vpop.f32.mrf.mxu0
        %v2059 = vadd.f32 %v2045, %v2058
        %v2060 = vpop.f32.mrf.mxu0
        %v2061 = vadd.f32 %v2047, %v2060
        %2062 = vdwg.mxu0
        %2063 = vmatpush.bf16.msra.mxu0 %v1983
        %2064 = vmatpush.bf16.msra.mxu0 %v1982
        %2065 = vmatpush.bf16.msra.mxu0 %v1981
        %2066 = vmatpush.bf16.msra.mxu0 %v1980
        %2067 = vmatpush.bf16.msra.mxu0 %v1979
        %2068 = vmatpush.bf16.msra.mxu0 %v1978
        %2069 = vmatpush.bf16.msra.mxu0 %v1977
        %2070 = vmatpush.bf16.msra.mxu0 %v1976
        %2071 = vmatmul.bf16.gmra.mxu0 %v1737
        %v2072 = vpop.f32.mrf.mxu0
        %v2073 = vadd.f32 %v2059, %v2072
        %v2074 = vpop.f32.mrf.mxu0
        %v2075 = vadd.f32 %v2061, %v2074
        %2076 = vdwg.mxu0
        %2077 = vmatpush.bf16.msra.mxu0 %v1991
        %2078 = vmatpush.bf16.msra.mxu0 %v1990
        %2079 = vmatpush.bf16.msra.mxu0 %v1989
        %2080 = vmatpush.bf16.msra.mxu0 %v1988
        %2081 = vmatpush.bf16.msra.mxu0 %v1987
        %2082 = vmatpush.bf16.msra.mxu0 %v1986
        %2083 = vmatpush.bf16.msra.mxu0 %v1985
        %2084 = vmatpush.bf16.msra.mxu0 %v1984
        %2085 = vmatmul.bf16.gmra.mxu0 %v1738
        %v2086 = vpop.f32.mrf.mxu0
        %v2087 = vadd.f32 %v2073, %v2086
        %v2088 = vpop.f32.mrf.mxu0
        %v2089 = vadd.f32 %v2075, %v2088
        %2090 = vdwg.mxu0
        %2091 = vmatpush.bf16.msra.mxu0 0
        %2092 = vmatpush.bf16.msra.mxu0 0
        %2093 = vmatpush.bf16.msra.mxu0 0
        %2094 = vmatpush.bf16.msra.mxu0 0
        %2095 = vmatpush.bf16.msra.mxu0 %v1995
        %2096 = vmatpush.bf16.msra.mxu0 %v1994
        %2097 = vmatpush.bf16.msra.mxu0 %v1993
        %2098 = vmatpush.bf16.msra.mxu0 %v1992
        %2099 = vmatmul.bf16.gmra.mxu0 %v2033
        %v2100 = vpop.f32.mrf.mxu0
        %v2101 = vadd.f32 %v2087, %v2100
        %v2102 = vpop.f32.mrf.mxu0
        %v2103 = vadd.f32 %v2089, %v2102
        %2104 = vdwg.mxu0
        %2105 = vst [vmem:[%s441] sm:$0xff] %v2101
        %2106 = vst [vmem:[%s441 + $0x8] sm:$0xff] %v2103
        %s2107 = smul.u32 2, %s24
        %p2108 = scmp.lt.s32.totalorder %s2107, 3
        %s2109 = scalar_select %p2108, %s2107, 3
        %s2110 = smul.addr %s2109, 8
        %s2111 = scalar_lea.vmem %s11, %s2110
        // Predicated region
        $region77: #{mtl_forward.1} parent=63 // pred_check
          %p2112 = pneg %p278
        $region78: #{mtl_forward.1} parent=63 // pred_check_branch
          %2114 = sbr.rel (%p2112) target = $region80
        $region79: #{mtl_forward.1} parent=63 // pred_region
          %s2115 = smul.u32 2, %s24
        $region80: #{mtl_forward.1} parent=63 // pred_fallthru
          _
      $region64: #{mtl_forward.1} parent=5 // pred_fallthru
        _
      %p2116 = scmp.le.s32.totalorder 2, %s19
      // Predicated region
      $region81: #{mtl_forward.1} parent=5 // pred_check
        %p2117 = pneg %p2116
      $region82: #{mtl_forward.1} parent=5 // pred_check_branch
        %2119 = sbr.rel (%p2117) target = $region84
      $region83: #{mtl_forward.1} parent=5 // pred_region
        %s2120 = ssub.s32 %s19, 2
        // Predicated region
        $region85: #{mtl_forward.1} parent=83 // pred_check
          %p2121 = pneg %p284
        $region86: #{mtl_forward.1} parent=83 // pred_check_branch
          %2123 = sbr.rel (%p2121) target = $region88
        $region87: #{mtl_forward.1} parent=83 // pred_region
          %s2124 = smul.u32 2, %s25
          %p2125 = scmp.lt.s32.totalorder %s2124, 3
          %s2126 = scalar_select %p2125, %s2124, 3
          %s2127 = smul.addr %s2126, 8
          %s2128 = scalar_lea.vmem %s11, %s2127
        $region88: #{mtl_forward.1} parent=83 // pred_fallthru
          _
      $region84: #{mtl_forward.1} parent=5 // pred_fallthru
        _
    $region6: #{mtl_forward.1} parent=1 // loop_footer
      %s23 = sadd.s32 1, %s19
    $region7: #{mtl_forward.1} parent=1 // loop_footer_branch
      %18 = sbr.rel target = $region3
    $region8: #{mtl_forward.1} parent=1 // loop_exit
      _
    %2129 = vsyncpa [#allocation3], 1
    %s2130 = scalar_lea.sflag [#allocation3], 1
    %2131 = vsyncpa %s2130, 1
    %2132 = vsyncpa [#allocation5], 1

</llo_original>
